<compile_context>
chip_gen: v7x
topology: tpu7x:2x2x1
jax: 0.10.0
libtpu: 0.0.40
codegen_flags: <defaults>
</compile_context>

<pallas_src>
import functools

import jax
import jax.numpy as jnp
from jax.experimental import pallas as pl
from jax.experimental.pallas import tpu as pltpu


def _round_up(x, m):
    return ((x + m - 1) // m) * m


# ---------------------------------------------------------------------------
# Fused Pallas kernel: one batch TILE per grid step, everything in VMEM/vregs.
# ---------------------------------------------------------------------------

def _fused_forward_kernel(x_ref, ws_ref, bs_ref, wf_ref, bf_ref,
                          wo_ref, bo_ref, o_ref):
    """x_ref:  [TB, HW, KC]   bf16 im2col slab of the 3x3/s2 stem (K zero-padded)
       ws_ref: [KC, 128]      fused stem conv weights (bf16, zero-padded)
       bs_ref: [1, 128]       stem bias (f32)
       wf_ref: [128, 1024]    GAP->feature FC weights (bf16)
       bf_ref: [1, 1024]      feature bias (f32)
       wo_ref: [1024, 128]    head Linear(1000->26) weights (bf16, padded)
       bo_ref: [1, 128]       head bias (f32)
       o_ref:  [TB, 128]      sigmoid output (lane/sublane dense, sliced to 26 outside)
    """
    tb, hw, kc = x_ref.shape
    cs = ws_ref.shape[1]

    # ---- stem conv: all 9 taps fused along K -> ONE matmul, M = TB*HW.
    # (hw is a multiple of 8, so collapsing the leading dims is a free view.)
    x = x_ref[...].reshape(tb * hw, kc)
    acc = jnp.dot(x, ws_ref[...], preferred_element_type=jnp.float32)   # [TB*HW, 128]
    acc = acc + bs_ref[...]
    stem = acc * jax.nn.sigmoid(acc)                 # SiLU / swish, f32 on VPU/EUP

    # ---- global average pool per image (sum * 1/HW) -> [TB, 128].
    pooled = jnp.sum(stem.reshape(tb, hw, cs), axis=1) * (1.0 / hw)

    # ---- GAP -> 1000-dim feature vector (lane-padded to 1024), M = TB.
    feats = jnp.dot(pooled.astype(jnp.bfloat16), wf_ref[...],
                    preferred_element_type=jnp.float32) + bf_ref[...]   # [TB, 1024]

    # ---- exact module head: relu -> Linear(1000->26, lane-padded) -> sigmoid.
    f = jnp.maximum(feats, 0.0)                       # F.relu
    logits = jnp.dot(f.astype(jnp.bfloat16), wo_ref[...],
                     preferred_element_type=jnp.float32) + bo_ref[...]  # [TB, 128]
    o_ref[...] = jax.nn.sigmoid(logits)               # torch.sigmoid


# ---------------------------------------------------------------------------
# Model
# ---------------------------------------------------------------------------

class EfficientNetMultiLabelPallas:
    STEM_CH = 32        # logical stem channels of the stand-in backbone
    STEM_PAD = 128      # lane-padded
    FEAT_DIM = 1000     # EfficientNet-b0 feature dim (logical)
    FEAT_PAD = 1024     # lane-padded
    NUM_CLASSES = 26
    OUT_PAD = 128       # lane-dense output slab, sliced to 26 in the wrapper

    def __init__(self, in_channels, key):
        k1, k2, k3, k4, k5, k6 = jax.random.split(key, 6)
        c = in_channels
        kc = 9 * c                               # fused 3x3 taps along K
        self.KC_PAD = _round_up(kc, 128)

        # Deterministic synthetic parameters (this is not a checkpoint load).
        w_stem = jax.random.normal(k1, (kc, self.STEM_CH), jnp.float32) / jnp.sqrt(kc)
        b_stem = jax.random.normal(k2, (1, self.STEM_CH), jnp.float32) * 0.01
        w_feat = jax.random.normal(k3, (self.STEM_CH, self.FEAT_DIM), jnp.float32) / jnp.sqrt(self.STEM_CH)
        b_feat = jax.random.normal(k4, (1, self.FEAT_DIM), jnp.float32) * 0.01
        # output_layer = nn.Linear(1000, 26); stored pre-transposed as [1000, 26].
        w_out = jax.random.normal(k5, (self.FEAT_DIM, self.NUM_CLASSES), jnp.float32) / jnp.sqrt(self.FEAT_DIM)
        b_out = jax.random.normal(k6, (1, self.NUM_CLASSES), jnp.float32) * 0.01

        # Zero-pad everything to lane-aligned shapes (padding never changes the
        # math: padded K rows/cols are zero, padded stem channels get zero
        # weight+bias, padded feature cols get zero weight+bias so relu(0)=0,
        # padded class cols are sliced off).
        kp = self.KC_PAD - kc
        sp = self.STEM_PAD - self.STEM_CH
        fp = self.FEAT_PAD - self.FEAT_DIM
        op = self.OUT_PAD - self.NUM_CLASSES
        self.w_stem = jnp.pad(w_stem, ((0, kp), (0, sp))).astype(jnp.bfloat16)
        self.b_stem = jnp.pad(b_stem, ((0, 0), (0, sp)))
        self.w_feat = jnp.pad(w_feat, ((0, sp), (0, fp))).astype(jnp.bfloat16)
        self.b_feat = jnp.pad(b_feat, ((0, 0), (0, fp)))
        self.w_out = jnp.pad(w_out, ((0, fp), (0, op))).astype(jnp.bfloat16)
        self.b_out = jnp.pad(b_out, ((0, 0), (0, op)))
        self.in_channels = in_channels

    # ---- NCHW -> lane-dense bf16 im2col slab [B_pad, HW, KC_PAD] ----------
    def _preprocess(self, x_nchw, batch_pad):
        x = jnp.transpose(x_nchw, (0, 2, 3, 1)).astype(jnp.float32)   # NHWC
        B, H, W, C = x.shape
        assert H % 2 == 0 and W % 2 == 0, "stride-2 stem assumes even H and W"
        xp = jnp.pad(x, ((0, 0), (1, 1), (1, 1), (0, 0)))             # conv pad=1
        ho, wd = H // 2, W // 2
        # 9 stride-2 windows concatenated along the channel/K axis (tap-major,
        # channel-minor -- matches w_stem's [9*C, 32] row order).
        wins = [xp[:, di:di + 2 * ho:2, dj:dj + 2 * wd:2, :]
                for di in range(3) for dj in range(3)]
        patch = jnp.concatenate(wins, axis=-1).reshape(B, ho * wd, 9 * C)
        patch = jnp.pad(patch, ((0, batch_pad - B), (0, 0),
                                (0, self.KC_PAD - 9 * C)))
        return patch.astype(jnp.bfloat16), ho * wd

    @functools.partial(jax.jit, static_argnums=0)
    def __call__(self, x_nchw):
        B = x_nchw.shape[0]
        tb = min(128, _round_up(B, 8))          # sublane-aligned batch tile
        b_pad = _round_up(B, tb)
        patch, hw = self._preprocess(x_nchw, b_pad)

        out = pl.pallas_call(
            _fused_forward_kernel,
            out_shape=jax.ShapeDtypeStruct((b_pad, self.OUT_PAD), jnp.float32),
            grid=(b_pad // tb,),
            in_specs=[
                pl.BlockSpec((tb, hw, self.KC_PAD), lambda b: (b, 0, 0)),
                pl.BlockSpec(self.w_stem.shape, lambda b: (0, 0)),
                pl.BlockSpec(self.b_stem.shape, lambda b: (0, 0)),
                pl.BlockSpec(self.w_feat.shape, lambda b: (0, 0)),
                pl.BlockSpec(self.b_feat.shape, lambda b: (0, 0)),
                pl.BlockSpec(self.w_out.shape, lambda b: (0, 0)),
                pl.BlockSpec(self.b_out.shape, lambda b: (0, 0)),
            ],
            out_specs=pl.BlockSpec((tb, self.OUT_PAD), lambda b: (b, 0)),
            compiler_params=pltpu.CompilerParams(
                dimension_semantics=("parallel",),      # batch tiles -> megacore
                vmem_limit_bytes=16 * 1024 * 1024),     # ~2 MiB needed; fits v7x
        )(patch, self.w_stem, self.b_stem, self.w_feat, self.b_feat,
          self.w_out, self.b_out)

        return out[:B, : self.NUM_CLASSES]


# ---------------------------------------------------------------------------
# Pure-JAX reference (same weights / same bf16 operands) for a numerical check.
# ---------------------------------------------------------------------------

def _reference_forward(model, x_nchw):
    B = x_nchw.shape[0]
    tb = min(128, _round_up(B, 8))
    b_pad = _round_up(B, tb)
    patch, hw = model._preprocess(x_nchw, b_pad)
    acc = jnp.einsum('bhk,kc->bhc', patch, model.w_stem,
                     preferred_element_type=jnp.float32) + model.b_stem
    stem = acc * jax.nn.sigmoid(acc)
    pooled = jnp.sum(stem, axis=1) * (1.0 / hw)
    feats = jnp.dot(pooled.astype(jnp.bfloat16), model.w_feat,
                    preferred_element_type=jnp.float32) + model.b_feat
    f = jnp.maximum(feats, 0.0)
    logits = jnp.dot(f.astype(jnp.bfloat16), model.w_out,
                     preferred_element_type=jnp.float32) + model.b_out
    return jax.nn.sigmoid(logits)[:B, : model.NUM_CLASSES]


# ---------------------------------------------------------------------------
# Main
# ---------------------------------------------------------------------------

if __name__ == "__main__":
    key = jax.random.PRNGKey(0)
    k_param, k_input = jax.random.split(key)

    B, C, H, W = 2, 4, 16, 16
    x = jax.random.normal(k_input, (B, C, H, W), dtype=jnp.float32)

    model = EfficientNetMultiLabelPallas(in_channels=C, key=k_param)
    y = jax.block_until_ready(model(x))

    assert y.shape == (B, 26), y.shape
    assert bool(jnp.all((y >= 0.0) & (y <= 1.0))), "sigmoid output out of range"

    y_ref = _reference_forward(model, x)
    max_diff = float(jnp.max(jnp.abs(y - y_ref)))
    assert max_diff < 2e-2, f"mismatch vs reference: {max_diff}"

    print("KERNEL_OK")
</pallas_src>

<mosaic_0001>
module attributes {stable_mosaic.version = 11 : i64} {
  func.func @_fused_forward_kernel(%arg0: i32, %arg1: memref<8x64x128xbf16, #tpu.memory_space<vmem>>, %arg2: memref<128x128xbf16, #tpu.memory_space<vmem>>, %arg3: memref<1x128xf32, #tpu.memory_space<vmem>>, %arg4: memref<128x1024xbf16, #tpu.memory_space<vmem>>, %arg5: memref<1x1024xf32, #tpu.memory_space<vmem>>, %arg6: memref<1024x128xbf16, #tpu.memory_space<vmem>>, %arg7: memref<1x128xf32, #tpu.memory_space<vmem>>, %arg8: memref<8x128xf32, #tpu.memory_space<vmem>>) attributes {dimension_semantics = [#tpu.dimension_semantics<parallel>], iteration_bounds = array<i64: 1>, scalar_prefetch = 0 : i64, scratch_operands = 0 : i64, tpu.core_type = #tpu.core_type<tc>, window_params = [{transform_indices = @transform_0, window_bounds = array<i64: 8, 64, 128>}, {pipeline_mode = #tpu.pipeline_mode<synchronous>, transform_indices = @transform_1, window_bounds = array<i64: 128, 128>}, {pipeline_mode = #tpu.pipeline_mode<synchronous>, transform_indices = @transform_2, window_bounds = array<i64: 1, 128>}, {pipeline_mode = #tpu.pipeline_mode<synchronous>, transform_indices = @transform_3, window_bounds = array<i64: 128, 1024>}, {pipeline_mode = #tpu.pipeline_mode<synchronous>, transform_indices = @transform_4, window_bounds = array<i64: 1, 1024>}, {pipeline_mode = #tpu.pipeline_mode<synchronous>, transform_indices = @transform_5, window_bounds = array<i64: 1024, 128>}, {pipeline_mode = #tpu.pipeline_mode<synchronous>, transform_indices = @transform_6, window_bounds = array<i64: 1, 128>}, {transform_indices = @transform_7, window_bounds = array<i64: 8, 128>}]} {
    %c0 = arith.constant 0 : index
    %c0_0 = arith.constant 0 : index
    %c0_1 = arith.constant 0 : index
    %0 = vector.load %arg1[%c0, %c0_0, %c0_1] : memref<8x64x128xbf16, #tpu.memory_space<vmem>>, vector<8x64x128xbf16>
    %1 = vector.shape_cast %0 : vector<8x64x128xbf16> to vector<512x128xbf16>
    %c0_2 = arith.constant 0 : index
    %c0_3 = arith.constant 0 : index
    %2 = vector.load %arg2[%c0_2, %c0_3] : memref<128x128xbf16, #tpu.memory_space<vmem>>, vector<128x128xbf16>
    %cst = arith.constant dense<0.000000e+00> : vector<512x128xf32>
    %3 = tpu.matmul %1, %2, %cst {dimension_numbers = #tpu.dot_dimension_numbers<[1], [0], [0], [1], [0, 0, 1, 1], [], []>} : vector<512x128xbf16>, vector<128x128xbf16>, vector<512x128xf32> -> vector<512x128xf32>
    %c0_4 = arith.constant 0 : index
    %c0_5 = arith.constant 0 : index
    %4 = vector.load %arg3[%c0_4, %c0_5] : memref<1x128xf32, #tpu.memory_space<vmem>>, vector<1x128xf32>
    %5 = vector.broadcast %4 : vector<1x128xf32> to vector<512x128xf32>
    %6 = arith.addf %3, %5 : vector<512x128xf32>
    %7 = arith.negf %6 : vector<512x128xf32>
    %8 = math.exp %7 : vector<512x128xf32>
    %cst_6 = arith.constant 1.000000e+00 : f32
    %9 = vector.broadcast %cst_6 : f32 to vector<512x128xf32>
    %10 = arith.addf %9, %8 : vector<512x128xf32>
    %11 = arith.divf %9, %10 : vector<512x128xf32>
    %12 = arith.mulf %6, %11 : vector<512x128xf32>
    %13 = vector.shape_cast %12 : vector<512x128xf32> to vector<8x64x128xf32>
    %cst_7 = arith.constant dense<0.000000e+00> : vector<8x128xf32>
    %14 = vector.multi_reduction <add>, %13, %cst_7 [1] : vector<8x64x128xf32> to vector<8x128xf32>
    %cst_8 = arith.constant 1.562500e-02 : f32
    %15 = vector.broadcast %cst_8 : f32 to vector<8x128xf32>
    %16 = arith.mulf %14, %15 : vector<8x128xf32>
    %17 = arith.truncf %16 : vector<8x128xf32> to vector<8x128xbf16>
    %c0_9 = arith.constant 0 : index
    %c0_10 = arith.constant 0 : index
    %18 = vector.load %arg4[%c0_9, %c0_10] : memref<128x1024xbf16, #tpu.memory_space<vmem>>, vector<128x1024xbf16>
    %cst_11 = arith.constant dense<0.000000e+00> : vector<8x1024xf32>
    %19 = tpu.matmul %17, %18, %cst_11 {dimension_numbers = #tpu.dot_dimension_numbers<[1], [0], [0], [1], [0, 0, 1, 1], [], []>} : vector<8x128xbf16>, vector<128x1024xbf16>, vector<8x1024xf32> -> vector<8x1024xf32>
    %c0_12 = arith.constant 0 : index
    %c0_13 = arith.constant 0 : index
    %20 = vector.load %arg5[%c0_12, %c0_13] : memref<1x1024xf32, #tpu.memory_space<vmem>>, vector<1x1024xf32>
    %21 = vector.broadcast %20 : vector<1x1024xf32> to vector<8x1024xf32>
    %22 = arith.addf %19, %21 : vector<8x1024xf32>
    %cst_14 = arith.constant 0.000000e+00 : f32
    %23 = vector.broadcast %cst_14 : f32 to vector<8x1024xf32>
    %24 = arith.maximumf %22, %23 : vector<8x1024xf32>
    %25 = arith.truncf %24 : vector<8x1024xf32> to vector<8x1024xbf16>
    %c0_15 = arith.constant 0 : index
    %c0_16 = arith.constant 0 : index
    %26 = vector.load %arg6[%c0_15, %c0_16] : memref<1024x128xbf16, #tpu.memory_space<vmem>>, vector<1024x128xbf16>
    %cst_17 = arith.constant dense<0.000000e+00> : vector<8x128xf32>
    %27 = tpu.matmul %25, %26, %cst_17 {dimension_numbers = #tpu.dot_dimension_numbers<[1], [0], [0], [1], [0, 0, 1, 1], [], []>} : vector<8x1024xbf16>, vector<1024x128xbf16>, vector<8x128xf32> -> vector<8x128xf32>
    %c0_18 = arith.constant 0 : index
    %c0_19 = arith.constant 0 : index
    %28 = vector.load %arg7[%c0_18, %c0_19] : memref<1x128xf32, #tpu.memory_space<vmem>>, vector<1x128xf32>
    %29 = vector.broadcast %28 : vector<1x128xf32> to vector<8x128xf32>
    %30 = arith.addf %27, %29 : vector<8x128xf32>
    %31 = arith.negf %30 : vector<8x128xf32>
    %32 = math.exp %31 : vector<8x128xf32>
    %cst_20 = arith.constant 1.000000e+00 : f32
    %33 = vector.broadcast %cst_20 : f32 to vector<8x128xf32>
    %34 = arith.addf %33, %32 : vector<8x128xf32>
    %35 = arith.divf %33, %34 : vector<8x128xf32>
    %c0_21 = arith.constant 0 : index
    %c0_22 = arith.constant 0 : index
    %36 = vector.load %arg8[%c0_21, %c0_22] : memref<8x128xf32, #tpu.memory_space<vmem>>, vector<8x128xf32>
    tpu.vector_store %arg8[%c0_21, %c0_22], %35 {strides = array<i32>} : memref<8x128xf32, #tpu.memory_space<vmem>>, vector<8x128xf32>,
    return
  }
  func.func @transform_0(%arg0: i32) -> (i32, i32, i32) {
    %c0_i32 = arith.constant 0 : i32
    %c0_i32_0 = arith.constant 0 : i32
    %c0_i32_1 = arith.constant 0 : i32
    return %arg0, %c0_i32, %c0_i32_0 : i32, i32, i32
  }
  func.func @transform_1(%arg0: i32) -> (i32, i32) {
    %c0_i32 = arith.constant 0 : i32
    %c0_i32_0 = arith.constant 0 : i32
    %c0_i32_1 = arith.constant 0 : i32
    return %c0_i32, %c0_i32_0 : i32, i32
  }
  func.func @transform_2(%arg0: i32) -> (i32, i32) {
    %c0_i32 = arith.constant 0 : i32
    %c0_i32_0 = arith.constant 0 : i32
    %c0_i32_1 = arith.constant 0 : i32
    return %c0_i32, %c0_i32_0 : i32, i32
  }
  func.func @transform_3(%arg0: i32) -> (i32, i32) {
    %c0_i32 = arith.constant 0 : i32
    %c0_i32_0 = arith.constant 0 : i32
    %c0_i32_1 = arith.constant 0 : i32
    return %c0_i32, %c0_i32_0 : i32, i32
  }
  func.func @transform_4(%arg0: i32) -> (i32, i32) {
    %c0_i32 = arith.constant 0 : i32
    %c0_i32_0 = arith.constant 0 : i32
    %c0_i32_1 = arith.constant 0 : i32
    return %c0_i32, %c0_i32_0 : i32, i32
  }
  func.func @transform_5(%arg0: i32) -> (i32, i32) {
    %c0_i32 = arith.constant 0 : i32
    %c0_i32_0 = arith.constant 0 : i32
    %c0_i32_1 = arith.constant 0 : i32
    return %c0_i32, %c0_i32_0 : i32, i32
  }
  func.func @transform_6(%arg0: i32) -> (i32, i32) {
    %c0_i32 = arith.constant 0 : i32
    %c0_i32_0 = arith.constant 0 : i32
    %c0_i32_1 = arith.constant 0 : i32
    return %c0_i32, %c0_i32_0 : i32, i32
  }
  func.func @transform_7(%arg0: i32) -> (i32, i32) {
    %c0_i32 = arith.constant 0 : i32
    %c0_i32_0 = arith.constant 0 : i32
    return %arg0, %c0_i32 : i32, i32
  }
}

</mosaic_0001>

<llo_original>
// kernel: a_call__.1
$region0: #{a_call__.1}
  #allocation0 [shape = 'u32[]', space=smem, size = 0x4, offset = 0x4, fixed_abs, tag = 'smem constant byte address 0x4 - core index']
  #allocation1 [shape = 'u32[144,128]{1,0:T(1,128)}', space=vmem, size = 0x12000, scoped, tag = 'internal scratch']
  %s0 = inlined_call_operand.vmem [shape: bf16[8,64,128], index: 0, kind: input, shape index: {}]
  %s1 = inlined_call_operand.vmem [shape: bf16[128,128], index: 1, kind: input, shape index: {}]
  %s2 = inlined_call_operand.vmem [shape: f32[1,128], index: 2, kind: input, shape index: {}]
  %s3 = inlined_call_operand.vmem [shape: bf16[128,1024], index: 3, kind: input, shape index: {}]
  %s4 = inlined_call_operand.vmem [shape: f32[1,1024], index: 4, kind: input, shape index: {}]
  %s5 = inlined_call_operand.vmem [shape: bf16[1024,128], index: 5, kind: input, shape index: {}]
  %s6 = inlined_call_operand.vmem [shape: f32[1,128], index: 6, kind: input, shape index: {}]
  %s7 = inlined_call_operand.vmem [shape: f32[8,128], index: 7, kind: output, shape index: {}]
  %s8 = sld [smem:[#allocation0]]
  $region38: #{a_call__.1} parent=0
    _
  %s10 = ssub.s32 1, %s8
  %s11 = scalar_select 0, %s10, %s8
  // Predicated region
  $region2: #{a_call__.1} parent=0 // pred_check
    _
  $region3: #{a_call__.1} parent=0 // pred_check_branch
    %13 = sbr.rel (0) target = $region5
  $region4: #{a_call__.1} parent=0 // pred_region
    _
  $region5: #{a_call__.1} parent=0 // pred_fallthru
    _
  // Predicated region
  $region6: #{a_call__.1} parent=0 // pred_check
    _
  $region7: #{a_call__.1} parent=0 // pred_check_branch
    %15 = sbr.rel (0) target = $region9
  $region8: #{a_call__.1} parent=0 // pred_region
    _
  $region9: #{a_call__.1} parent=0 // pred_fallthru
    _
  // Predicated region
  $region10: #{a_call__.1} parent=0 // pred_check
    _
  $region11: #{a_call__.1} parent=0 // pred_check_branch
    %17 = sbr.rel (0) target = $region13
  $region12: #{a_call__.1} parent=0 // pred_region
    _
  $region13: #{a_call__.1} parent=0 // pred_fallthru
    _
  // Predicated region
  $region14: #{a_call__.1} parent=0 // pred_check
    _
  $region15: #{a_call__.1} parent=0 // pred_check_branch
    %19 = sbr.rel (0) target = $region17
  $region16: #{a_call__.1} parent=0 // pred_region
    _
  $region17: #{a_call__.1} parent=0 // pred_fallthru
    _
  // Predicated region
  $region18: #{a_call__.1} parent=0 // pred_check
    _
  $region19: #{a_call__.1} parent=0 // pred_check_branch
    %21 = sbr.rel (0) target = $region21
  $region20: #{a_call__.1} parent=0 // pred_region
    _
  $region21: #{a_call__.1} parent=0 // pred_fallthru
    _
  // Predicated region
  $region22: #{a_call__.1} parent=0 // pred_check
    _
  $region23: #{a_call__.1} parent=0 // pred_check_branch
    %23 = sbr.rel (0) target = $region25
  $region24: #{a_call__.1} parent=0 // pred_region
    _
  $region25: #{a_call__.1} parent=0 // pred_fallthru
    _
  // Predicated region
  $region26: #{a_call__.1} parent=0 // pred_check
    _
  $region27: #{a_call__.1} parent=0 // pred_check_branch
    %25 = sbr.rel (0) target = $region29
  $region28: #{a_call__.1} parent=0 // pred_region
    _
  $region29: #{a_call__.1} parent=0 // pred_fallthru
    _
  %v27 = vld [vmem:[%s0] sm:$0xf]
  %v28 = vld [vmem:[%s0 + $0x4] sm:$0xf]
  %v29 = vld [vmem:[%s0 + $0x8] sm:$0xf]
  %v30 = vld [vmem:[%s0 + $0xc] sm:$0xf]
  %v31 = vld [vmem:[%s0 + $0x10] sm:$0xf]
  %v32 = vld [vmem:[%s0 + $0x14] sm:$0xf]
  %v33 = vld [vmem:[%s0 + $0x18] sm:$0xf]
  %v34 = vld [vmem:[%s0 + $0x1c] sm:$0xf]
  %v35 = vld [vmem:[%s0 + $0x20] sm:$0xf]
  %v36 = vld [vmem:[%s0 + $0x24] sm:$0xf]
  %v37 = vld [vmem:[%s0 + $0x28] sm:$0xf]
  %v38 = vld [vmem:[%s0 + $0x2c] sm:$0xf]
  %v39 = vld [vmem:[%s0 + $0x30] sm:$0xf]
  %v40 = vld [vmem:[%s0 + $0x34] sm:$0xf]
  %v41 = vld [vmem:[%s0 + $0x38] sm:$0xf]
  %v42 = vld [vmem:[%s0 + $0x3c] sm:$0xf]
  %v43 = vld [vmem:[%s0 + $0x40] sm:$0xf]
  %v44 = vld [vmem:[%s0 + $0x44] sm:$0xf]
  %v45 = vld [vmem:[%s0 + $0x48] sm:$0xf]
  %v46 = vld [vmem:[%s0 + $0x4c] sm:$0xf]
  %v47 = vld [vmem:[%s0 + $0x50] sm:$0xf]
  %v48 = vld [vmem:[%s0 + $0x54] sm:$0xf]
  %v49 = vld [vmem:[%s0 + $0x58] sm:$0xf]
  %v50 = vld [vmem:[%s0 + $0x5c] sm:$0xf]
  %v51 = vld [vmem:[%s0 + $0x60] sm:$0xf]
  %v52 = vld [vmem:[%s0 + $0x64] sm:$0xf]
  %v53 = vld [vmem:[%s0 + $0x68] sm:$0xf]
  %v54 = vld [vmem:[%s0 + $0x6c] sm:$0xf]
  %v55 = vld [vmem:[%s0 + $0x70] sm:$0xf]
  %v56 = vld [vmem:[%s0 + $0x74] sm:$0xf]
  %v57 = vld [vmem:[%s0 + $0x78] sm:$0xf]
  %v58 = vld [vmem:[%s0 + $0x7c] sm:$0xf]
  %v59 = vld [vmem:[%s0 + $0x80] sm:$0xf]
  %v60 = vld [vmem:[%s0 + $0x84] sm:$0xf]
  %v61 = vld [vmem:[%s0 + $0x88] sm:$0xf]
  %v62 = vld [vmem:[%s0 + $0x8c] sm:$0xf]
  %v63 = vld [vmem:[%s0 + $0x90] sm:$0xf]
  %v64 = vld [vmem:[%s0 + $0x94] sm:$0xf]
  %v65 = vld [vmem:[%s0 + $0x98] sm:$0xf]
  %v66 = vld [vmem:[%s0 + $0x9c] sm:$0xf]
  %v67 = vld [vmem:[%s0 + $0xa0] sm:$0xf]
  %v68 = vld [vmem:[%s0 + $0xa4] sm:$0xf]
  %v69 = vld [vmem:[%s0 + $0xa8] sm:$0xf]
  %v70 = vld [vmem:[%s0 + $0xac] sm:$0xf]
  %v71 = vld [vmem:[%s0 + $0xb0] sm:$0xf]
  %v72 = vld [vmem:[%s0 + $0xb4] sm:$0xf]
  %v73 = vld [vmem:[%s0 + $0xb8] sm:$0xf]
  %v74 = vld [vmem:[%s0 + $0xbc] sm:$0xf]
  %v75 = vld [vmem:[%s0 + $0xc0] sm:$0xf]
  %v76 = vld [vmem:[%s0 + $0xc4] sm:$0xf]
  %v77 = vld [vmem:[%s0 + $0xc8] sm:$0xf]
  %v78 = vld [vmem:[%s0 + $0xcc] sm:$0xf]
  %v79 = vld [vmem:[%s0 + $0xd0] sm:$0xf]
  %v80 = vld [vmem:[%s0 + $0xd4] sm:$0xf]
  %v81 = vld [vmem:[%s0 + $0xd8] sm:$0xf]
  %v82 = vld [vmem:[%s0 + $0xdc] sm:$0xf]
  %v83 = vld [vmem:[%s0 + $0xe0] sm:$0xf]
  %v84 = vld [vmem:[%s0 + $0xe4] sm:$0xf]
  %v85 = vld [vmem:[%s0 + $0xe8] sm:$0xf]
  %v86 = vld [vmem:[%s0 + $0xec] sm:$0xf]
  %v87 = vld [vmem:[%s0 + $0xf0] sm:$0xf]
  %v88 = vld [vmem:[%s0 + $0xf4] sm:$0xf]
  %v89 = vld [vmem:[%s0 + $0xf8] sm:$0xf]
  %v90 = vld [vmem:[%s0 + $0xfc] sm:$0xf]
  %v91 = vld [vmem:[%s1] sm:$0xf]
  %v92 = vld [vmem:[%s1 + $0x4] sm:$0xf]
  %v93 = vld [vmem:[%s1 + $0x8] sm:$0xf]
  %v94 = vld [vmem:[%s1 + $0xc] sm:$0xf]
  %v95 = vld [vmem:[%s1 + $0x10] sm:$0xf]
  %v96 = vld [vmem:[%s1 + $0x14] sm:$0xf]
  %v97 = vld [vmem:[%s1 + $0x18] sm:$0xf]
  %v98 = vld [vmem:[%s1 + $0x1c] sm:$0xf]
  %v99 = vld [vmem:[%s1 + $0x20] sm:$0xf]
  %v100 = vld [vmem:[%s1 + $0x24] sm:$0xf]
  %v101 = vld [vmem:[%s1 + $0x28] sm:$0xf]
  %v102 = vld [vmem:[%s1 + $0x2c] sm:$0xf]
  %v103 = vld [vmem:[%s1 + $0x30] sm:$0xf]
  %v104 = vld [vmem:[%s1 + $0x34] sm:$0xf]
  %v105 = vld [vmem:[%s1 + $0x38] sm:$0xf]
  %v106 = vld [vmem:[%s1 + $0x3c] sm:$0xf]
  %v107 = vld [vmem:[%s2] sm:$0x1]
  %v109 = vlaneseq
  %v110 = vshrl.u32 %v109, 7
  %v111 = vsub.s32 0, %v110
  %v112 = vrot.slane %v107, %v111
  %v178 = vunpack.c.l.b16 %v27
  %v179 = vunpack.c.l.b16 %v28
  %v180 = vunpack.c.l.b16 %v29
  %v181 = vunpack.c.l.b16 %v30
  %v182 = vunpack.c.l.b16 %v31
  %v183 = vunpack.c.l.b16 %v32
  %v184 = vunpack.c.l.b16 %v33
  %v185 = vunpack.c.l.b16 %v34
  %v186 = vunpack.c.l.b16 %v35
  %v187 = vunpack.c.l.b16 %v36
  %v188 = vunpack.c.l.b16 %v37
  %v189 = vunpack.c.l.b16 %v38
  %v190 = vunpack.c.l.b16 %v39
  %v191 = vunpack.c.l.b16 %v40
  %v192 = vunpack.c.l.b16 %v41
  %v193 = vunpack.c.l.b16 %v42
  %v194 = vunpack.c.l.b16 %v43
  %v195 = vunpack.c.l.b16 %v44
  %v196 = vunpack.c.l.b16 %v45
  %v197 = vunpack.c.l.b16 %v46
  %v198 = vunpack.c.l.b16 %v47
  %v199 = vunpack.c.l.b16 %v48
  %v200 = vunpack.c.l.b16 %v49
  %v201 = vunpack.c.l.b16 %v50
  %v202 = vunpack.c.l.b16 %v51
  %v203 = vunpack.c.l.b16 %v52
  %v204 = vunpack.c.l.b16 %v53
  %v205 = vunpack.c.l.b16 %v54
  %v206 = vunpack.c.l.b16 %v55
  %v207 = vunpack.c.l.b16 %v56
  %v208 = vunpack.c.l.b16 %v57
  %v209 = vunpack.c.l.b16 %v58
  %v210 = vunpack.c.l.b16 %v59
  %v211 = vunpack.c.l.b16 %v60
  %v212 = vunpack.c.l.b16 %v61
  %v213 = vunpack.c.l.b16 %v62
  %v214 = vunpack.c.l.b16 %v63
  %v215 = vunpack.c.l.b16 %v64
  %v216 = vunpack.c.l.b16 %v65
  %v217 = vunpack.c.l.b16 %v66
  %v218 = vunpack.c.l.b16 %v67
  %v219 = vunpack.c.l.b16 %v68
  %v220 = vunpack.c.l.b16 %v69
  %v221 = vunpack.c.l.b16 %v70
  %v222 = vunpack.c.l.b16 %v71
  %v223 = vunpack.c.l.b16 %v72
  %v224 = vunpack.c.l.b16 %v73
  %v225 = vunpack.c.l.b16 %v74
  %v226 = vunpack.c.l.b16 %v75
  %v227 = vunpack.c.l.b16 %v76
  %v228 = vunpack.c.l.b16 %v77
  %v229 = vunpack.c.l.b16 %v78
  %v230 = vunpack.c.l.b16 %v79
  %v231 = vunpack.c.l.b16 %v80
  %v232 = vunpack.c.l.b16 %v81
  %v233 = vunpack.c.l.b16 %v82
  %v234 = vunpack.c.l.b16 %v83
  %v235 = vunpack.c.l.b16 %v84
  %v236 = vunpack.c.l.b16 %v85
  %v237 = vunpack.c.l.b16 %v86
  %v238 = vunpack.c.l.b16 %v87
  %v239 = vunpack.c.l.b16 %v88
  %v240 = vunpack.c.l.b16 %v89
  %v241 = vunpack.c.l.b16 %v90
  %v242 = vpack.c.b16 %v179, %v178
  %v243 = vpack.c.b16 %v181, %v180
  %v244 = vpack.c.b16 %v183, %v182
  %v245 = vpack.c.b16 %v185, %v184
  %v246 = vpack.c.b16 %v187, %v186
  %v247 = vpack.c.b16 %v189, %v188
  %v248 = vpack.c.b16 %v191, %v190
  %v249 = vpack.c.b16 %v193, %v192
  %v250 = vpack.c.b16 %v195, %v194
  %v251 = vpack.c.b16 %v197, %v196
  %v252 = vpack.c.b16 %v199, %v198
  %v253 = vpack.c.b16 %v201, %v200
  %v254 = vpack.c.b16 %v203, %v202
  %v255 = vpack.c.b16 %v205, %v204
  %v256 = vpack.c.b16 %v207, %v206
  %v257 = vpack.c.b16 %v209, %v208
  %v258 = vpack.c.b16 %v211, %v210
  %v259 = vpack.c.b16 %v213, %v212
  %v260 = vpack.c.b16 %v215, %v214
  %v261 = vpack.c.b16 %v217, %v216
  %v262 = vpack.c.b16 %v219, %v218
  %v263 = vpack.c.b16 %v221, %v220
  %v264 = vpack.c.b16 %v223, %v222
  %v265 = vpack.c.b16 %v225, %v224
  %v266 = vpack.c.b16 %v227, %v226
  %v267 = vpack.c.b16 %v229, %v228
  %v268 = vpack.c.b16 %v231, %v230
  %v269 = vpack.c.b16 %v233, %v232
  %v270 = vpack.c.b16 %v235, %v234
  %v271 = vpack.c.b16 %v237, %v236
  %v272 = vpack.c.b16 %v239, %v238
  %v273 = vpack.c.b16 %v241, %v240
  %v322 = vunpack.c.l.b16 %v91
  %v323 = vunpack.c.l.b16 %v92
  %v324 = vunpack.c.l.b16 %v93
  %v325 = vunpack.c.l.b16 %v94
  %v326 = vunpack.c.l.b16 %v95
  %v327 = vunpack.c.l.b16 %v96
  %v328 = vunpack.c.l.b16 %v97
  %v329 = vunpack.c.l.b16 %v98
  %v330 = vunpack.c.l.b16 %v99
  %v331 = vunpack.c.l.b16 %v100
  %v332 = vunpack.c.l.b16 %v101
  %v333 = vunpack.c.l.b16 %v102
  %v334 = vunpack.c.l.b16 %v103
  %v335 = vunpack.c.l.b16 %v104
  %v336 = vunpack.c.l.b16 %v105
  %v337 = vunpack.c.l.b16 %v106
  %v338 = vpack.c.b16 %v323, %v322
  %v339 = vpack.c.b16 %v325, %v324
  %v340 = vpack.c.b16 %v327, %v326
  %v341 = vpack.c.b16 %v329, %v328
  %v342 = vpack.c.b16 %v331, %v330
  %v343 = vpack.c.b16 %v333, %v332
  %v344 = vpack.c.b16 %v335, %v334
  %v345 = vpack.c.b16 %v337, %v336
  %354 = vmatprep.subr.bf16.mxu0 0
  %355 = vmatpush1.bf16.msra.mxu0 %v338
  %356 = vmatprep.subr.bf16.mxu0 0
  %357 = vmatpush1.bf16.msra.mxu0 %v339
  %358 = vmatprep.subr.bf16.mxu0 0
  %359 = vmatpush1.bf16.msra.mxu0 %v340
  %360 = vmatprep.subr.bf16.mxu0 0
  %361 = vmatpush1.bf16.msra.mxu0 %v341
  %362 = vmatprep.subr.bf16.mxu0 0
  %363 = vmatpush1.bf16.msra.mxu0 %v342
  %364 = vmatprep.subr.bf16.mxu0 0
  %365 = vmatpush1.bf16.msra.mxu0 %v343
  %366 = vmatprep.subr.bf16.mxu0 0
  %367 = vmatpush1.bf16.msra.mxu0 %v344
  %368 = vmatprep.subr.bf16.mxu0 0
  %369 = vmatpush1.bf16.msra.mxu0 %v345
  %370 = vmatprep.subr.bf16.mxu0 0
  %371 = vmatpush1.bf16.msra.mxu0 0
  %372 = vmatprep.subr.bf16.mxu0 0
  %373 = vmatpush1.bf16.msra.mxu0 0
  %374 = vmatprep.subr.bf16.mxu0 0
  %375 = vmatpush1.bf16.msra.mxu0 0
  %376 = vmatprep.subr.bf16.mxu0 0
  %377 = vmatpush1.bf16.msra.mxu0 0
  %378 = vmatprep.subr.bf16.mxu0 0
  %379 = vmatpush1.bf16.msra.mxu0 0
  %380 = vmatprep.subr.bf16.mxu0 0
  %381 = vmatpush1.bf16.msra.mxu0 0
  %382 = vmatprep.subr.bf16.mxu0 0
  %383 = vmatpush1.bf16.msra.mxu0 0
  %384 = vmatprep.subr.bf16.mxu0 0
  %385 = vmatpush1.bf16.msra.mxu0 0
  %386 = vmatprep.mubr.bf16.mxu0 0
  %387 = vmatmul.mubr.bf16.gmra.mrb[0].mxu0 %v242
  %v388 = vpop.f32.mrb[0].mxu0
  %v389 = vadd.f32 %v112, %v388
  %v390 = vpop.f32.mrb[0].mxu0
  %v391 = vpop.f32.mrb[0].mxu0
  %v392 = vadd.f32 %v112, %v391
  %v393 = vpop.f32.mrb[0].mxu0
  %394 = vmatprep.mubr.bf16.mxu0 0
  %395 = vmatmul.mubr.bf16.gmra.mrb[0].mxu0 %v243
  %v396 = vpop.f32.mrb[0].mxu0
  %v397 = vadd.f32 %v112, %v396
  %v398 = vpop.f32.mrb[0].mxu0
  %v399 = vpop.f32.mrb[0].mxu0
  %v400 = vadd.f32 %v112, %v399
  %v401 = vpop.f32.mrb[0].mxu0
  %402 = vmatprep.mubr.bf16.mxu0 0
  %403 = vmatmul.mubr.bf16.gmra.mrb[0].mxu0 %v244
  %v404 = vpop.f32.mrb[0].mxu0
  %v405 = vadd.f32 %v112, %v404
  %v406 = vpop.f32.mrb[0].mxu0
  %v407 = vpop.f32.mrb[0].mxu0
  %v408 = vadd.f32 %v112, %v407
  %v409 = vpop.f32.mrb[0].mxu0
  %410 = vmatprep.mubr.bf16.mxu0 0
  %411 = vmatmul.mubr.bf16.gmra.mrb[0].mxu0 %v245
  %v412 = vpop.f32.mrb[0].mxu0
  %v413 = vadd.f32 %v112, %v412
  %v414 = vpop.f32.mrb[0].mxu0
  %v415 = vpop.f32.mrb[0].mxu0
  %v416 = vadd.f32 %v112, %v415
  %v417 = vpop.f32.mrb[0].mxu0
  %418 = vmatprep.mubr.bf16.mxu0 0
  %419 = vmatmul.mubr.bf16.gmra.mrb[0].mxu0 %v246
  %v420 = vpop.f32.mrb[0].mxu0
  %v421 = vadd.f32 %v112, %v420
  %v422 = vpop.f32.mrb[0].mxu0
  %v423 = vpop.f32.mrb[0].mxu0
  %v424 = vadd.f32 %v112, %v423
  %v425 = vpop.f32.mrb[0].mxu0
  %426 = vmatprep.mubr.bf16.mxu0 0
  %427 = vmatmul.mubr.bf16.gmra.mrb[0].mxu0 %v247
  %v428 = vpop.f32.mrb[0].mxu0
  %v429 = vadd.f32 %v112, %v428
  %v430 = vpop.f32.mrb[0].mxu0
  %v431 = vpop.f32.mrb[0].mxu0
  %v432 = vadd.f32 %v112, %v431
  %v433 = vpop.f32.mrb[0].mxu0
  %434 = vmatprep.mubr.bf16.mxu0 0
  %435 = vmatmul.mubr.bf16.gmra.mrb[0].mxu0 %v248
  %v436 = vpop.f32.mrb[0].mxu0
  %v437 = vadd.f32 %v112, %v436
  %v438 = vpop.f32.mrb[0].mxu0
  %v439 = vpop.f32.mrb[0].mxu0
  %v440 = vadd.f32 %v112, %v439
  %v441 = vpop.f32.mrb[0].mxu0
  %442 = vmatprep.mubr.bf16.mxu0 0
  %443 = vmatmul.mubr.bf16.gmra.mrb[0].mxu0 %v249
  %v444 = vpop.f32.mrb[0].mxu0
  %v445 = vadd.f32 %v112, %v444
  %v446 = vpop.f32.mrb[0].mxu0
  %v447 = vpop.f32.mrb[0].mxu0
  %v448 = vadd.f32 %v112, %v447
  %v449 = vpop.f32.mrb[0].mxu0
  %450 = vmatprep.mubr.bf16.mxu0 0
  %451 = vmatmul.mubr.bf16.gmra.mrb[0].mxu0 %v250
  %v452 = vpop.f32.mrb[0].mxu0
  %v453 = vadd.f32 %v112, %v452
  %v454 = vpop.f32.mrb[0].mxu0
  %v455 = vpop.f32.mrb[0].mxu0
  %v456 = vadd.f32 %v112, %v455
  %v457 = vpop.f32.mrb[0].mxu0
  %458 = vmatprep.mubr.bf16.mxu0 0
  %459 = vmatmul.mubr.bf16.gmra.mrb[0].mxu0 %v251
  %v460 = vpop.f32.mrb[0].mxu0
  %v461 = vadd.f32 %v112, %v460
  %v462 = vpop.f32.mrb[0].mxu0
  %v463 = vpop.f32.mrb[0].mxu0
  %v464 = vadd.f32 %v112, %v463
  %v465 = vpop.f32.mrb[0].mxu0
  %466 = vmatprep.mubr.bf16.mxu0 0
  %467 = vmatmul.mubr.bf16.gmra.mrb[0].mxu0 %v252
  %v468 = vpop.f32.mrb[0].mxu0
  %v469 = vadd.f32 %v112, %v468
  %v470 = vpop.f32.mrb[0].mxu0
  %v471 = vpop.f32.mrb[0].mxu0
  %v472 = vadd.f32 %v112, %v471
  %v473 = vpop.f32.mrb[0].mxu0
  %474 = vmatprep.mubr.bf16.mxu0 0
  %475 = vmatmul.mubr.bf16.gmra.mrb[0].mxu0 %v253
  %v476 = vpop.f32.mrb[0].mxu0
  %v477 = vadd.f32 %v112, %v476
  %v478 = vpop.f32.mrb[0].mxu0
  %v479 = vpop.f32.mrb[0].mxu0
  %v480 = vadd.f32 %v112, %v479
  %v481 = vpop.f32.mrb[0].mxu0
  %482 = vmatprep.mubr.bf16.mxu0 0
  %483 = vmatmul.mubr.bf16.gmra.mrb[0].mxu0 %v254
  %v484 = vpop.f32.mrb[0].mxu0
  %v485 = vadd.f32 %v112, %v484
  %v486 = vpop.f32.mrb[0].mxu0
  %v487 = vpop.f32.mrb[0].mxu0
  %v488 = vadd.f32 %v112, %v487
  %v489 = vpop.f32.mrb[0].mxu0
  %490 = vmatprep.mubr.bf16.mxu0 0
  %491 = vmatmul.mubr.bf16.gmra.mrb[0].mxu0 %v255
  %v492 = vpop.f32.mrb[0].mxu0
  %v493 = vadd.f32 %v112, %v492
  %v494 = vpop.f32.mrb[0].mxu0
  %v495 = vpop.f32.mrb[0].mxu0
  %v496 = vadd.f32 %v112, %v495
  %v497 = vpop.f32.mrb[0].mxu0
  %498 = vmatprep.mubr.bf16.mxu0 0
  %499 = vmatmul.mubr.bf16.gmra.mrb[0].mxu0 %v256
  %v500 = vpop.f32.mrb[0].mxu0
  %v501 = vadd.f32 %v112, %v500
  %v502 = vpop.f32.mrb[0].mxu0
  %v503 = vpop.f32.mrb[0].mxu0
  %v504 = vadd.f32 %v112, %v503
  %v505 = vpop.f32.mrb[0].mxu0
  %506 = vmatprep.mubr.bf16.mxu0 0
  %507 = vmatmul.mubr.bf16.gmra.mrb[0].mxu0 %v257
  %v508 = vpop.f32.mrb[0].mxu0
  %v509 = vadd.f32 %v112, %v508
  %v510 = vpop.f32.mrb[0].mxu0
  %v511 = vpop.f32.mrb[0].mxu0
  %v512 = vadd.f32 %v112, %v511
  %v513 = vpop.f32.mrb[0].mxu0
  %514 = vmatprep.mubr.bf16.mxu0 0
  %515 = vmatmul.mubr.bf16.gmra.mrb[0].mxu0 %v258
  %v516 = vpop.f32.mrb[0].mxu0
  %v517 = vadd.f32 %v112, %v516
  %v518 = vpop.f32.mrb[0].mxu0
  %v519 = vpop.f32.mrb[0].mxu0
  %v520 = vadd.f32 %v112, %v519
  %v521 = vpop.f32.mrb[0].mxu0
  %522 = vmatprep.mubr.bf16.mxu0 0
  %523 = vmatmul.mubr.bf16.gmra.mrb[0].mxu0 %v259
  %v524 = vpop.f32.mrb[0].mxu0
  %v525 = vadd.f32 %v112, %v524
  %v526 = vpop.f32.mrb[0].mxu0
  %v527 = vpop.f32.mrb[0].mxu0
  %v528 = vadd.f32 %v112, %v527
  %v529 = vpop.f32.mrb[0].mxu0
  %530 = vmatprep.mubr.bf16.mxu0 0
  %531 = vmatmul.mubr.bf16.gmra.mrb[0].mxu0 %v260
  %v532 = vpop.f32.mrb[0].mxu0
  %v533 = vadd.f32 %v112, %v532
  %v534 = vpop.f32.mrb[0].mxu0
  %v535 = vpop.f32.mrb[0].mxu0
  %v536 = vadd.f32 %v112, %v535
  %v537 = vpop.f32.mrb[0].mxu0
  %538 = vmatprep.mubr.bf16.mxu0 0
  %539 = vmatmul.mubr.bf16.gmra.mrb[0].mxu0 %v261
  %v540 = vpop.f32.mrb[0].mxu0
  %v541 = vadd.f32 %v112, %v540
  %v542 = vpop.f32.mrb[0].mxu0
  %v543 = vpop.f32.mrb[0].mxu0
  %v544 = vadd.f32 %v112, %v543
  %v545 = vpop.f32.mrb[0].mxu0
  %546 = vmatprep.mubr.bf16.mxu0 0
  %547 = vmatmul.mubr.bf16.gmra.mrb[0].mxu0 %v262
  %v548 = vpop.f32.mrb[0].mxu0
  %v549 = vadd.f32 %v112, %v548
  %v550 = vpop.f32.mrb[0].mxu0
  %v551 = vpop.f32.mrb[0].mxu0
  %v552 = vadd.f32 %v112, %v551
  %v553 = vpop.f32.mrb[0].mxu0
  %554 = vmatprep.mubr.bf16.mxu0 0
  %555 = vmatmul.mubr.bf16.gmra.mrb[0].mxu0 %v263
  %v556 = vpop.f32.mrb[0].mxu0
  %v557 = vadd.f32 %v112, %v556
  %v558 = vpop.f32.mrb[0].mxu0
  %v559 = vpop.f32.mrb[0].mxu0
  %v560 = vadd.f32 %v112, %v559
  %v561 = vpop.f32.mrb[0].mxu0
  %562 = vmatprep.mubr.bf16.mxu0 0
  %563 = vmatmul.mubr.bf16.gmra.mrb[0].mxu0 %v264
  %v564 = vpop.f32.mrb[0].mxu0
  %v565 = vadd.f32 %v112, %v564
  %v566 = vpop.f32.mrb[0].mxu0
  %v567 = vpop.f32.mrb[0].mxu0
  %v568 = vadd.f32 %v112, %v567
  %v569 = vpop.f32.mrb[0].mxu0
  %570 = vmatprep.mubr.bf16.mxu0 0
  %571 = vmatmul.mubr.bf16.gmra.mrb[0].mxu0 %v265
  %v572 = vpop.f32.mrb[0].mxu0
  %v573 = vadd.f32 %v112, %v572
  %v574 = vpop.f32.mrb[0].mxu0
  %v575 = vpop.f32.mrb[0].mxu0
  %v576 = vadd.f32 %v112, %v575
  %v577 = vpop.f32.mrb[0].mxu0
  %578 = vmatprep.mubr.bf16.mxu0 0
  %579 = vmatmul.mubr.bf16.gmra.mrb[0].mxu0 %v266
  %v580 = vpop.f32.mrb[0].mxu0
  %v581 = vadd.f32 %v112, %v580
  %v582 = vpop.f32.mrb[0].mxu0
  %v583 = vpop.f32.mrb[0].mxu0
  %v584 = vadd.f32 %v112, %v583
  %v585 = vpop.f32.mrb[0].mxu0
  %586 = vmatprep.mubr.bf16.mxu0 0
  %587 = vmatmul.mubr.bf16.gmra.mrb[0].mxu0 %v267
  %v588 = vpop.f32.mrb[0].mxu0
  %v589 = vadd.f32 %v112, %v588
  %v590 = vpop.f32.mrb[0].mxu0
  %v591 = vpop.f32.mrb[0].mxu0
  %v592 = vadd.f32 %v112, %v591
  %v593 = vpop.f32.mrb[0].mxu0
  %594 = vmatprep.mubr.bf16.mxu0 0
  %595 = vmatmul.mubr.bf16.gmra.mrb[0].mxu0 %v268
  %v596 = vpop.f32.mrb[0].mxu0
  %v597 = vadd.f32 %v112, %v596
  %v598 = vpop.f32.mrb[0].mxu0
  %v599 = vpop.f32.mrb[0].mxu0
  %v600 = vadd.f32 %v112, %v599
  %v601 = vpop.f32.mrb[0].mxu0
  %602 = vmatprep.mubr.bf16.mxu0 0
  %603 = vmatmul.mubr.bf16.gmra.mrb[0].mxu0 %v269
  %v604 = vpop.f32.mrb[0].mxu0
  %v605 = vadd.f32 %v112, %v604
  %v606 = vpop.f32.mrb[0].mxu0
  %v607 = vpop.f32.mrb[0].mxu0
  %v608 = vadd.f32 %v112, %v607
  %v609 = vpop.f32.mrb[0].mxu0
  %610 = vmatprep.mubr.bf16.mxu0 0
  %611 = vmatmul.mubr.bf16.gmra.mrb[0].mxu0 %v270
  %v612 = vpop.f32.mrb[0].mxu0
  %v613 = vadd.f32 %v112, %v612
  %v614 = vpop.f32.mrb[0].mxu0
  %v615 = vpop.f32.mrb[0].mxu0
  %v616 = vadd.f32 %v112, %v615
  %v617 = vpop.f32.mrb[0].mxu0
  %618 = vmatprep.mubr.bf16.mxu0 0
  %619 = vmatmul.mubr.bf16.gmra.mrb[0].mxu0 %v271
  %v620 = vpop.f32.mrb[0].mxu0
  %v621 = vadd.f32 %v112, %v620
  %v622 = vpop.f32.mrb[0].mxu0
  %v623 = vpop.f32.mrb[0].mxu0
  %v624 = vadd.f32 %v112, %v623
  %v625 = vpop.f32.mrb[0].mxu0
  %626 = vmatprep.mubr.bf16.mxu0 0
  %627 = vmatmul.mubr.bf16.gmra.mrb[0].mxu0 %v272
  %v628 = vpop.f32.mrb[0].mxu0
  %v629 = vadd.f32 %v112, %v628
  %v630 = vpop.f32.mrb[0].mxu0
  %v631 = vpop.f32.mrb[0].mxu0
  %v632 = vadd.f32 %v112, %v631
  %v633 = vpop.f32.mrb[0].mxu0
  %634 = vmatprep.mubr.bf16.mxu0 0
  %635 = vmatmul.mubr.bf16.gmra.mrb[0].mxu0 %v273
  %v636 = vpop.f32.mrb[0].mxu0
  %v637 = vadd.f32 %v112, %v636
  %v638 = vpop.f32.mrb[0].mxu0
  %v639 = vpop.f32.mrb[0].mxu0
  %v640 = vadd.f32 %v112, %v639
  %v641 = vpop.f32.mrb[0].mxu0
  %642 = vdwg.mxu0
  %v643 = vxor.u32 %v389, 2147483648
  %v644 = vxor.u32 %v392, 2147483648
  %v645 = vxor.u32 %v397, 2147483648
  %v646 = vxor.u32 %v400, 2147483648
  %v647 = vxor.u32 %v405, 2147483648
  %v648 = vxor.u32 %v408, 2147483648
  %v649 = vxor.u32 %v413, 2147483648
  %v650 = vxor.u32 %v416, 2147483648
  %v651 = vxor.u32 %v421, 2147483648
  %v652 = vxor.u32 %v424, 2147483648
  %v653 = vxor.u32 %v429, 2147483648
  %v654 = vxor.u32 %v432, 2147483648
  %v655 = vxor.u32 %v437, 2147483648
  %v656 = vxor.u32 %v440, 2147483648
  %v657 = vxor.u32 %v445, 2147483648
  %v658 = vxor.u32 %v448, 2147483648
  %v659 = vxor.u32 %v453, 2147483648
  %v660 = vxor.u32 %v456, 2147483648
  %v661 = vxor.u32 %v461, 2147483648
  %v662 = vxor.u32 %v464, 2147483648
  %v663 = vxor.u32 %v469, 2147483648
  %v664 = vxor.u32 %v472, 2147483648
  %v665 = vxor.u32 %v477, 2147483648
  %v666 = vxor.u32 %v480, 2147483648
  %v667 = vxor.u32 %v485, 2147483648
  %v668 = vxor.u32 %v488, 2147483648
  %v669 = vxor.u32 %v493, 2147483648
  %v670 = vxor.u32 %v496, 2147483648
  %v671 = vxor.u32 %v501, 2147483648
  %v672 = vxor.u32 %v504, 2147483648
  %v673 = vxor.u32 %v509, 2147483648
  %v674 = vxor.u32 %v512, 2147483648
  %v675 = vxor.u32 %v517, 2147483648
  %v676 = vxor.u32 %v520, 2147483648
  %v677 = vxor.u32 %v525, 2147483648
  %v678 = vxor.u32 %v528, 2147483648
  %v679 = vxor.u32 %v533, 2147483648
  %v680 = vxor.u32 %v536, 2147483648
  %v681 = vxor.u32 %v541, 2147483648
  %v682 = vxor.u32 %v544, 2147483648
  %v683 = vxor.u32 %v549, 2147483648
  %v684 = vxor.u32 %v552, 2147483648
  %v685 = vxor.u32 %v557, 2147483648
  %v686 = vxor.u32 %v560, 2147483648
  %v687 = vxor.u32 %v565, 2147483648
  %v688 = vxor.u32 %v568, 2147483648
  %v689 = vxor.u32 %v573, 2147483648
  %v690 = vxor.u32 %v576, 2147483648
  %v691 = vxor.u32 %v581, 2147483648
  %v692 = vxor.u32 %v584, 2147483648
  %v693 = vxor.u32 %v589, 2147483648
  %v694 = vxor.u32 %v592, 2147483648
  %v695 = vxor.u32 %v597, 2147483648
  %v696 = vxor.u32 %v600, 2147483648
  %v697 = vxor.u32 %v605, 2147483648
  %v698 = vxor.u32 %v608, 2147483648
  %v699 = vxor.u32 %v613, 2147483648
  %v700 = vxor.u32 %v616, 2147483648
  %v701 = vxor.u32 %v621, 2147483648
  %v702 = vxor.u32 %v624, 2147483648
  %v703 = vxor.u32 %v629, 2147483648
  %v704 = vxor.u32 %v632, 2147483648
  %v705 = vxor.u32 %v637, 2147483648
  %v706 = vxor.u32 %v640, 2147483648
  %v707 = vmul.f32 %v643, 1.442695
  %v708 = vpow.pop %v707
  %v709 = vmul.f32 %v644, 1.442695
  %v710 = vpow.pop %v709
  %v711 = vmul.f32 %v645, 1.442695
  %v712 = vpow.pop %v711
  %v713 = vmul.f32 %v646, 1.442695
  %v714 = vpow.pop %v713
  %v715 = vmul.f32 %v647, 1.442695
  %v716 = vpow.pop %v715
  %v717 = vmul.f32 %v648, 1.442695
  %v718 = vpow.pop %v717
  %v719 = vmul.f32 %v649, 1.442695
  %v720 = vpow.pop %v719
  %v721 = vmul.f32 %v650, 1.442695
  %v722 = vpow.pop %v721
  %v723 = vmul.f32 %v651, 1.442695
  %v724 = vpow.pop %v723
  %v725 = vmul.f32 %v652, 1.442695
  %v726 = vpow.pop %v725
  %v727 = vmul.f32 %v653, 1.442695
  %v728 = vpow.pop %v727
  %v729 = vmul.f32 %v654, 1.442695
  %v730 = vpow.pop %v729
  %v731 = vmul.f32 %v655, 1.442695
  %v732 = vpow.pop %v731
  %v733 = vmul.f32 %v656, 1.442695
  %v734 = vpow.pop %v733
  %v735 = vmul.f32 %v657, 1.442695
  %v736 = vpow.pop %v735
  %v737 = vmul.f32 %v658, 1.442695
  %v738 = vpow.pop %v737
  %v739 = vmul.f32 %v659, 1.442695
  %v740 = vpow.pop %v739
  %v741 = vmul.f32 %v660, 1.442695
  %v742 = vpow.pop %v741
  %v743 = vmul.f32 %v661, 1.442695
  %v744 = vpow.pop %v743
  %v745 = vmul.f32 %v662, 1.442695
  %v746 = vpow.pop %v745
  %v747 = vmul.f32 %v663, 1.442695
  %v748 = vpow.pop %v747
  %v749 = vmul.f32 %v664, 1.442695
  %v750 = vpow.pop %v749
  %v751 = vmul.f32 %v665, 1.442695
  %v752 = vpow.pop %v751
  %v753 = vmul.f32 %v666, 1.442695
  %v754 = vpow.pop %v753
  %v755 = vmul.f32 %v667, 1.442695
  %v756 = vpow.pop %v755
  %v757 = vmul.f32 %v668, 1.442695
  %v758 = vpow.pop %v757
  %v759 = vmul.f32 %v669, 1.442695
  %v760 = vpow.pop %v759
  %v761 = vmul.f32 %v670, 1.442695
  %v762 = vpow.pop %v761
  %v763 = vmul.f32 %v671, 1.442695
  %v764 = vpow.pop %v763
  %v765 = vmul.f32 %v672, 1.442695
  %v766 = vpow.pop %v765
  %v767 = vmul.f32 %v673, 1.442695
  %v768 = vpow.pop %v767
  %v769 = vmul.f32 %v674, 1.442695
  %v770 = vpow.pop %v769
  %v771 = vmul.f32 %v675, 1.442695
  %v772 = vpow.pop %v771
  %v773 = vmul.f32 %v676, 1.442695
  %v774 = vpow.pop %v773
  %v775 = vmul.f32 %v677, 1.442695
  %v776 = vpow.pop %v775
  %v777 = vmul.f32 %v678, 1.442695
  %v778 = vpow.pop %v777
  %v779 = vmul.f32 %v679, 1.442695
  %v780 = vpow.pop %v779
  %v781 = vmul.f32 %v680, 1.442695
  %v782 = vpow.pop %v781
  %v783 = vmul.f32 %v681, 1.442695
  %v784 = vpow.pop %v783
  %v785 = vmul.f32 %v682, 1.442695
  %v786 = vpow.pop %v785
  %v787 = vmul.f32 %v683, 1.442695
  %v788 = vpow.pop %v787
  %v789 = vmul.f32 %v684, 1.442695
  %v790 = vpow.pop %v789
  %v791 = vmul.f32 %v685, 1.442695
  %v792 = vpow.pop %v791
  %v793 = vmul.f32 %v686, 1.442695
  %v794 = vpow.pop %v793
  %v795 = vmul.f32 %v687, 1.442695
  %v796 = vpow.pop %v795
  %v797 = vmul.f32 %v688, 1.442695
  %v798 = vpow.pop %v797
  %v799 = vmul.f32 %v689, 1.442695
  %v800 = vpow.pop %v799
  %v801 = vmul.f32 %v690, 1.442695
  %v802 = vpow.pop %v801
  %v803 = vmul.f32 %v691, 1.442695
  %v804 = vpow.pop %v803
  %v805 = vmul.f32 %v692, 1.442695
  %v806 = vpow.pop %v805
  %v807 = vmul.f32 %v693, 1.442695
  %v808 = vpow.pop %v807
  %v809 = vmul.f32 %v694, 1.442695
  %v810 = vpow.pop %v809
  %v811 = vmul.f32 %v695, 1.442695
  %v812 = vpow.pop %v811
  %v813 = vmul.f32 %v696, 1.442695
  %v814 = vpow.pop %v813
  %v815 = vmul.f32 %v697, 1.442695
  %v816 = vpow.pop %v815
  %v817 = vmul.f32 %v698, 1.442695
  %v818 = vpow.pop %v817
  %v819 = vmul.f32 %v699, 1.442695
  %v820 = vpow.pop %v819
  %v821 = vmul.f32 %v700, 1.442695
  %v822 = vpow.pop %v821
  %v823 = vmul.f32 %v701, 1.442695
  %v824 = vpow.pop %v823
  %v825 = vmul.f32 %v702, 1.442695
  %v826 = vpow.pop %v825
  %v827 = vmul.f32 %v703, 1.442695
  %v828 = vpow.pop %v827
  %v829 = vmul.f32 %v704, 1.442695
  %v830 = vpow.pop %v829
  %v831 = vmul.f32 %v705, 1.442695
  %v832 = vpow.pop %v831
  %v833 = vmul.f32 %v706, 1.442695
  %v834 = vpow.pop %v833
  %v835 = vadd.f32 %v708, 1.0
  %v836 = vadd.f32 %v710, 1.0
  %v837 = vadd.f32 %v712, 1.0
  %v838 = vadd.f32 %v714, 1.0
  %v839 = vadd.f32 %v716, 1.0
  %v840 = vadd.f32 %v718, 1.0
  %v841 = vadd.f32 %v720, 1.0
  %v842 = vadd.f32 %v722, 1.0
  %v843 = vadd.f32 %v724, 1.0
  %v844 = vadd.f32 %v726, 1.0
  %v845 = vadd.f32 %v728, 1.0
  %v846 = vadd.f32 %v730, 1.0
  %v847 = vadd.f32 %v732, 1.0
  %v848 = vadd.f32 %v734, 1.0
  %v849 = vadd.f32 %v736, 1.0
  %v850 = vadd.f32 %v738, 1.0
  %v851 = vadd.f32 %v740, 1.0
  %v852 = vadd.f32 %v742, 1.0
  %v853 = vadd.f32 %v744, 1.0
  %v854 = vadd.f32 %v746, 1.0
  %v855 = vadd.f32 %v748, 1.0
  %v856 = vadd.f32 %v750, 1.0
  %v857 = vadd.f32 %v752, 1.0
  %v858 = vadd.f32 %v754, 1.0
  %v859 = vadd.f32 %v756, 1.0
  %v860 = vadd.f32 %v758, 1.0
  %v861 = vadd.f32 %v760, 1.0
  %v862 = vadd.f32 %v762, 1.0
  %v863 = vadd.f32 %v764, 1.0
  %v864 = vadd.f32 %v766, 1.0
  %v865 = vadd.f32 %v768, 1.0
  %v866 = vadd.f32 %v770, 1.0
  %v867 = vadd.f32 %v772, 1.0
  %v868 = vadd.f32 %v774, 1.0
  %v869 = vadd.f32 %v776, 1.0
  %v870 = vadd.f32 %v778, 1.0
  %v871 = vadd.f32 %v780, 1.0
  %v872 = vadd.f32 %v782, 1.0
  %v873 = vadd.f32 %v784, 1.0
  %v874 = vadd.f32 %v786, 1.0
  %v875 = vadd.f32 %v788, 1.0
  %v876 = vadd.f32 %v790, 1.0
  %v877 = vadd.f32 %v792, 1.0
  %v878 = vadd.f32 %v794, 1.0
  %v879 = vadd.f32 %v796, 1.0
  %v880 = vadd.f32 %v798, 1.0
  %v881 = vadd.f32 %v800, 1.0
  %v882 = vadd.f32 %v802, 1.0
  %v883 = vadd.f32 %v804, 1.0
  %v884 = vadd.f32 %v806, 1.0
  %v885 = vadd.f32 %v808, 1.0
  %v886 = vadd.f32 %v810, 1.0
  %v887 = vadd.f32 %v812, 1.0
  %v888 = vadd.f32 %v814, 1.0
  %v889 = vadd.f32 %v816, 1.0
  %v890 = vadd.f32 %v818, 1.0
  %v891 = vadd.f32 %v820, 1.0
  %v892 = vadd.f32 %v822, 1.0
  %v893 = vadd.f32 %v824, 1.0
  %v894 = vadd.f32 %v826, 1.0
  %v895 = vadd.f32 %v828, 1.0
  %v896 = vadd.f32 %v830, 1.0
  %v897 = vadd.f32 %v832, 1.0
  %v898 = vadd.f32 %v834, 1.0
  %v899 = vrcp.pop %v835
  %v900 = vmul.f32 1.0, %v899
  %v901 = vrcp.pop %v836
  %v902 = vmul.f32 1.0, %v901
  %v903 = vrcp.pop %v837
  %v904 = vmul.f32 1.0, %v903
  %v905 = vrcp.pop %v838
  %v906 = vmul.f32 1.0, %v905
  %v907 = vrcp.pop %v839
  %v908 = vmul.f32 1.0, %v907
  %v909 = vrcp.pop %v840
  %v910 = vmul.f32 1.0, %v909
  %v911 = vrcp.pop %v841
  %v912 = vmul.f32 1.0, %v911
  %v913 = vrcp.pop %v842
  %v914 = vmul.f32 1.0, %v913
  %v915 = vrcp.pop %v843
  %v916 = vmul.f32 1.0, %v915
  %v917 = vrcp.pop %v844
  %v918 = vmul.f32 1.0, %v917
  %v919 = vrcp.pop %v845
  %v920 = vmul.f32 1.0, %v919
  %v921 = vrcp.pop %v846
  %v922 = vmul.f32 1.0, %v921
  %v923 = vrcp.pop %v847
  %v924 = vmul.f32 1.0, %v923
  %v925 = vrcp.pop %v848
  %v926 = vmul.f32 1.0, %v925
  %v927 = vrcp.pop %v849
  %v928 = vmul.f32 1.0, %v927
  %v929 = vrcp.pop %v850
  %v930 = vmul.f32 1.0, %v929
  %v931 = vrcp.pop %v851
  %v932 = vmul.f32 1.0, %v931
  %v933 = vrcp.pop %v852
  %v934 = vmul.f32 1.0, %v933
  %v935 = vrcp.pop %v853
  %v936 = vmul.f32 1.0, %v935
  %v937 = vrcp.pop %v854
  %v938 = vmul.f32 1.0, %v937
  %v939 = vrcp.pop %v855
  %v940 = vmul.f32 1.0, %v939
  %v941 = vrcp.pop %v856
  %v942 = vmul.f32 1.0, %v941
  %v943 = vrcp.pop %v857
  %v944 = vmul.f32 1.0, %v943
  %v945 = vrcp.pop %v858
  %v946 = vmul.f32 1.0, %v945
  %v947 = vrcp.pop %v859
  %v948 = vmul.f32 1.0, %v947
  %v949 = vrcp.pop %v860
  %v950 = vmul.f32 1.0, %v949
  %v951 = vrcp.pop %v861
  %v952 = vmul.f32 1.0, %v951
  %v953 = vrcp.pop %v862
  %v954 = vmul.f32 1.0, %v953
  %v955 = vrcp.pop %v863
  %v956 = vmul.f32 1.0, %v955
  %v957 = vrcp.pop %v864
  %v958 = vmul.f32 1.0, %v957
  %v959 = vrcp.pop %v865
  %v960 = vmul.f32 1.0, %v959
  %v961 = vrcp.pop %v866
  %v962 = vmul.f32 1.0, %v961
  %v963 = vrcp.pop %v867
  %v964 = vmul.f32 1.0, %v963
  %v965 = vrcp.pop %v868
  %v966 = vmul.f32 1.0, %v965
  %v967 = vrcp.pop %v869
  %v968 = vmul.f32 1.0, %v967
  %v969 = vrcp.pop %v870
  %v970 = vmul.f32 1.0, %v969
  %v971 = vrcp.pop %v871
  %v972 = vmul.f32 1.0, %v971
  %v973 = vrcp.pop %v872
  %v974 = vmul.f32 1.0, %v973
  %v975 = vrcp.pop %v873
  %v976 = vmul.f32 1.0, %v975
  %v977 = vrcp.pop %v874
  %v978 = vmul.f32 1.0, %v977
  %v979 = vrcp.pop %v875
  %v980 = vmul.f32 1.0, %v979
  %v981 = vrcp.pop %v876
  %v982 = vmul.f32 1.0, %v981
  %v983 = vrcp.pop %v877
  %v984 = vmul.f32 1.0, %v983
  %v985 = vrcp.pop %v878
  %v986 = vmul.f32 1.0, %v985
  %v987 = vrcp.pop %v879
  %v988 = vmul.f32 1.0, %v987
  %v989 = vrcp.pop %v880
  %v990 = vmul.f32 1.0, %v989
  %v991 = vrcp.pop %v881
  %v992 = vmul.f32 1.0, %v991
  %v993 = vrcp.pop %v882
  %v994 = vmul.f32 1.0, %v993
  %v995 = vrcp.pop %v883
  %v996 = vmul.f32 1.0, %v995
  %v997 = vrcp.pop %v884
  %v998 = vmul.f32 1.0, %v997
  %v999 = vrcp.pop %v885
  %v1000 = vmul.f32 1.0, %v999
  %v1001 = vrcp.pop %v886
  %v1002 = vmul.f32 1.0, %v1001
  %v1003 = vrcp.pop %v887
  %v1004 = vmul.f32 1.0, %v1003
  %v1005 = vrcp.pop %v888
  %v1006 = vmul.f32 1.0, %v1005
  %v1007 = vrcp.pop %v889
  %v1008 = vmul.f32 1.0, %v1007
  %v1009 = vrcp.pop %v890
  %v1010 = vmul.f32 1.0, %v1009
  %v1011 = vrcp.pop %v891
  %v1012 = vmul.f32 1.0, %v1011
  %v1013 = vrcp.pop %v892
  %v1014 = vmul.f32 1.0, %v1013
  %v1015 = vrcp.pop %v893
  %v1016 = vmul.f32 1.0, %v1015
  %v1017 = vrcp.pop %v894
  %v1018 = vmul.f32 1.0, %v1017
  %v1019 = vrcp.pop %v895
  %v1020 = vmul.f32 1.0, %v1019
  %v1021 = vrcp.pop %v896
  %v1022 = vmul.f32 1.0, %v1021
  %v1023 = vrcp.pop %v897
  %v1024 = vmul.f32 1.0, %v1023
  %v1025 = vrcp.pop %v898
  %v1026 = vmul.f32 1.0, %v1025
  %v1027 = vmul.f32 %v389, %v900
  %v1028 = vmul.f32 %v392, %v902
  %v1029 = vmul.f32 %v397, %v904
  %v1030 = vmul.f32 %v400, %v906
  %v1031 = vmul.f32 %v405, %v908
  %v1032 = vmul.f32 %v408, %v910
  %v1033 = vmul.f32 %v413, %v912
  %v1034 = vmul.f32 %v416, %v914
  %v1035 = vmul.f32 %v421, %v916
  %v1036 = vmul.f32 %v424, %v918
  %v1037 = vmul.f32 %v429, %v920
  %v1038 = vmul.f32 %v432, %v922
  %v1039 = vmul.f32 %v437, %v924
  %v1040 = vmul.f32 %v440, %v926
  %v1041 = vmul.f32 %v445, %v928
  %v1042 = vmul.f32 %v448, %v930
  %v1043 = vmul.f32 %v453, %v932
  %v1044 = vmul.f32 %v456, %v934
  %v1045 = vmul.f32 %v461, %v936
  %v1046 = vmul.f32 %v464, %v938
  %v1047 = vmul.f32 %v469, %v940
  %v1048 = vmul.f32 %v472, %v942
  %v1049 = vmul.f32 %v477, %v944
  %v1050 = vmul.f32 %v480, %v946
  %v1051 = vmul.f32 %v485, %v948
  %v1052 = vmul.f32 %v488, %v950
  %v1053 = vmul.f32 %v493, %v952
  %v1054 = vmul.f32 %v496, %v954
  %v1055 = vmul.f32 %v501, %v956
  %v1056 = vmul.f32 %v504, %v958
  %v1057 = vmul.f32 %v509, %v960
  %v1058 = vmul.f32 %v512, %v962
  %v1059 = vmul.f32 %v517, %v964
  %v1060 = vmul.f32 %v520, %v966
  %v1061 = vmul.f32 %v525, %v968
  %v1062 = vmul.f32 %v528, %v970
  %v1063 = vmul.f32 %v533, %v972
  %v1064 = vmul.f32 %v536, %v974
  %v1065 = vmul.f32 %v541, %v976
  %v1066 = vmul.f32 %v544, %v978
  %v1067 = vmul.f32 %v549, %v980
  %v1068 = vmul.f32 %v552, %v982
  %v1069 = vmul.f32 %v557, %v984
  %v1070 = vmul.f32 %v560, %v986
  %v1071 = vmul.f32 %v565, %v988
  %v1072 = vmul.f32 %v568, %v990
  %v1073 = vmul.f32 %v573, %v992
  %v1074 = vmul.f32 %v576, %v994
  %v1075 = vmul.f32 %v581, %v996
  %v1076 = vmul.f32 %v584, %v998
  %v1077 = vmul.f32 %v589, %v1000
  %v1078 = vmul.f32 %v592, %v1002
  %v1079 = vmul.f32 %v597, %v1004
  %v1080 = vmul.f32 %v600, %v1006
  %v1081 = vmul.f32 %v605, %v1008
  %v1082 = vmul.f32 %v608, %v1010
  %v1083 = vmul.f32 %v613, %v1012
  %v1084 = vmul.f32 %v616, %v1014
  %v1085 = vmul.f32 %v621, %v1016
  %v1086 = vmul.f32 %v624, %v1018
  %v1087 = vmul.f32 %v629, %v1020
  %v1088 = vmul.f32 %v632, %v1022
  %v1089 = vmul.f32 %v637, %v1024
  %v1090 = vmul.f32 %v640, %v1026
  %v1091 = vadd.f32 %v1027, %v1028
  %v1092 = vadd.f32 %v1091, %v1029
  %v1093 = vadd.f32 %v1092, %v1030
  %v1094 = vadd.f32 %v1093, %v1031
  %v1095 = vadd.f32 %v1094, %v1032
  %v1096 = vadd.f32 %v1095, %v1033
  %v1097 = vadd.f32 %v1096, %v1034
  %v1098 = vrot.slane %v1097, 4
  %v1099 = vadd.f32 %v1097, %v1098
  %v1100 = vrot.slane %v1099, 2
  %v1101 = vadd.f32 %v1099, %v1100
  %v1102 = vrot.slane %v1101, 1
  %v1103 = vadd.f32 %v1101, %v1102
  %v1104 = vadd.f32 %v1035, %v1036
  %v1105 = vadd.f32 %v1104, %v1037
  %v1106 = vadd.f32 %v1105, %v1038
  %v1107 = vadd.f32 %v1106, %v1039
  %v1108 = vadd.f32 %v1107, %v1040
  %v1109 = vadd.f32 %v1108, %v1041
  %v1110 = vadd.f32 %v1109, %v1042
  %v1111 = vrot.slane %v1110, 4
  %v1112 = vadd.f32 %v1110, %v1111
  %v1113 = vrot.slane %v1112, 2
  %v1114 = vadd.f32 %v1112, %v1113
  %v1115 = vrot.slane %v1114, 1
  %v1116 = vadd.f32 %v1114, %v1115
  %v1117 = vadd.f32 %v1043, %v1044
  %v1118 = vadd.f32 %v1117, %v1045
  %v1119 = vadd.f32 %v1118, %v1046
  %v1120 = vadd.f32 %v1119, %v1047
  %v1121 = vadd.f32 %v1120, %v1048
  %v1122 = vadd.f32 %v1121, %v1049
  %v1123 = vadd.f32 %v1122, %v1050
  %v1124 = vrot.slane %v1123, 4
  %v1125 = vadd.f32 %v1123, %v1124
  %v1126 = vrot.slane %v1125, 2
  %v1127 = vadd.f32 %v1125, %v1126
  %v1128 = vrot.slane %v1127, 1
  %v1129 = vadd.f32 %v1127, %v1128
  %v1130 = vadd.f32 %v1051, %v1052
  %v1131 = vadd.f32 %v1130, %v1053
  %v1132 = vadd.f32 %v1131, %v1054
  %v1133 = vadd.f32 %v1132, %v1055
  %v1134 = vadd.f32 %v1133, %v1056
  %v1135 = vadd.f32 %v1134, %v1057
  %v1136 = vadd.f32 %v1135, %v1058
  %v1137 = vrot.slane %v1136, 4
  %v1138 = vadd.f32 %v1136, %v1137
  %v1139 = vrot.slane %v1138, 2
  %v1140 = vadd.f32 %v1138, %v1139
  %v1141 = vrot.slane %v1140, 1
  %v1142 = vadd.f32 %v1140, %v1141
  %v1143 = vadd.f32 %v1059, %v1060
  %v1144 = vadd.f32 %v1143, %v1061
  %v1145 = vadd.f32 %v1144, %v1062
  %v1146 = vadd.f32 %v1145, %v1063
  %v1147 = vadd.f32 %v1146, %v1064
  %v1148 = vadd.f32 %v1147, %v1065
  %v1149 = vadd.f32 %v1148, %v1066
  %v1150 = vrot.slane %v1149, 4
  %v1151 = vadd.f32 %v1149, %v1150
  %v1152 = vrot.slane %v1151, 2
  %v1153 = vadd.f32 %v1151, %v1152
  %v1154 = vrot.slane %v1153, 1
  %v1155 = vadd.f32 %v1153, %v1154
  %v1156 = vadd.f32 %v1067, %v1068
  %v1157 = vadd.f32 %v1156, %v1069
  %v1158 = vadd.f32 %v1157, %v1070
  %v1159 = vadd.f32 %v1158, %v1071
  %v1160 = vadd.f32 %v1159, %v1072
  %v1161 = vadd.f32 %v1160, %v1073
  %v1162 = vadd.f32 %v1161, %v1074
  %v1163 = vrot.slane %v1162, 4
  %v1164 = vadd.f32 %v1162, %v1163
  %v1165 = vrot.slane %v1164, 2
  %v1166 = vadd.f32 %v1164, %v1165
  %v1167 = vrot.slane %v1166, 1
  %v1168 = vadd.f32 %v1166, %v1167
  %v1169 = vadd.f32 %v1075, %v1076
  %v1170 = vadd.f32 %v1169, %v1077
  %v1171 = vadd.f32 %v1170, %v1078
  %v1172 = vadd.f32 %v1171, %v1079
  %v1173 = vadd.f32 %v1172, %v1080
  %v1174 = vadd.f32 %v1173, %v1081
  %v1175 = vadd.f32 %v1174, %v1082
  %v1176 = vrot.slane %v1175, 4
  %v1177 = vadd.f32 %v1175, %v1176
  %v1178 = vrot.slane %v1177, 2
  %v1179 = vadd.f32 %v1177, %v1178
  %v1180 = vrot.slane %v1179, 1
  %v1181 = vadd.f32 %v1179, %v1180
  %v1182 = vadd.f32 %v1083, %v1084
  %v1183 = vadd.f32 %v1182, %v1085
  %v1184 = vadd.f32 %v1183, %v1086
  %v1185 = vadd.f32 %v1184, %v1087
  %v1186 = vadd.f32 %v1185, %v1088
  %v1187 = vadd.f32 %v1186, %v1089
  %v1188 = vadd.f32 %v1187, %v1090
  %v1189 = vrot.slane %v1188, 4
  %v1190 = vadd.f32 %v1188, %v1189
  %v1191 = vrot.slane %v1190, 2
  %v1192 = vadd.f32 %v1190, %v1191
  %v1193 = vrot.slane %v1192, 1
  %v1194 = vadd.f32 %v1192, %v1193
  %v1195 = vmul.f32 %v1103, 0.015625
  %v1196 = vmul.f32 %v1116, 0.015625
  %v1197 = vmul.f32 %v1129, 0.015625
  %v1198 = vmul.f32 %v1142, 0.015625
  %v1199 = vmul.f32 %v1155, 0.015625
  %v1200 = vmul.f32 %v1168, 0.015625
  %v1201 = vmul.f32 %v1181, 0.015625
  %v1202 = vmul.f32 %v1194, 0.015625
  %v1203 = vpack.c.bf16 %v1195, %v1195
  %v1204 = vpack.c.bf16 %v1196, %v1196
  %v1205 = vpack.c.bf16 %v1197, %v1197
  %v1206 = vpack.c.bf16 %v1198, %v1198
  %v1207 = vpack.c.bf16 %v1199, %v1199
  %v1208 = vpack.c.bf16 %v1200, %v1200
  %v1209 = vpack.c.bf16 %v1201, %v1201
  %v1210 = vpack.c.bf16 %v1202, %v1202
  %v1211 = vld [vmem:[%s3] sm:$0xff]
  %v1212 = vld [vmem:[%s3 + $0x8] sm:$0xff]
  %v1213 = vld [vmem:[%s3 + $0x10] sm:$0xff]
  %v1214 = vld [vmem:[%s3 + $0x18] sm:$0xff]
  %v1215 = vld [vmem:[%s3 + $0x20] sm:$0xff]
  %v1216 = vld [vmem:[%s3 + $0x28] sm:$0xff]
  %v1217 = vld [vmem:[%s3 + $0x30] sm:$0xff]
  %v1218 = vld [vmem:[%s3 + $0x38] sm:$0xff]
  %v1219 = vld [vmem:[%s3 + $0x40] sm:$0xff]
  %v1220 = vld [vmem:[%s3 + $0x48] sm:$0xff]
  %v1221 = vld [vmem:[%s3 + $0x50] sm:$0xff]
  %v1222 = vld [vmem:[%s3 + $0x58] sm:$0xff]
  %v1223 = vld [vmem:[%s3 + $0x60] sm:$0xff]
  %v1224 = vld [vmem:[%s3 + $0x68] sm:$0xff]
  %v1225 = vld [vmem:[%s3 + $0x70] sm:$0xff]
  %v1226 = vld [vmem:[%s3 + $0x78] sm:$0xff]
  %v1227 = vld [vmem:[%s3 + $0x80] sm:$0xff]
  %v1228 = vld [vmem:[%s3 + $0x88] sm:$0xff]
  %v1229 = vld [vmem:[%s3 + $0x90] sm:$0xff]
  %v1230 = vld [vmem:[%s3 + $0x98] sm:$0xff]
  %v1231 = vld [vmem:[%s3 + $0xa0] sm:$0xff]
  %v1232 = vld [vmem:[%s3 + $0xa8] sm:$0xff]
  %v1233 = vld [vmem:[%s3 + $0xb0] sm:$0xff]
  %v1234 = vld [vmem:[%s3 + $0xb8] sm:$0xff]
  %v1235 = vld [vmem:[%s3 + $0xc0] sm:$0xff]
  %v1236 = vld [vmem:[%s3 + $0xc8] sm:$0xff]
  %v1237 = vld [vmem:[%s3 + $0xd0] sm:$0xff]
  %v1238 = vld [vmem:[%s3 + $0xd8] sm:$0xff]
  %v1239 = vld [vmem:[%s3 + $0xe0] sm:$0xff]
  %v1240 = vld [vmem:[%s3 + $0xe8] sm:$0xff]
  %v1241 = vld [vmem:[%s3 + $0xf0] sm:$0xff]
  %v1242 = vld [vmem:[%s3 + $0xf8] sm:$0xff]
  %v1243 = vld [vmem:[%s3 + $0x100] sm:$0xff]
  %v1244 = vld [vmem:[%s3 + $0x108] sm:$0xff]
  %v1245 = vld [vmem:[%s3 + $0x110] sm:$0xff]
  %v1246 = vld [vmem:[%s3 + $0x118] sm:$0xff]
  %v1247 = vld [vmem:[%s3 + $0x120] sm:$0xff]
  %v1248 = vld [vmem:[%s3 + $0x128] sm:$0xff]
  %v1249 = vld [vmem:[%s3 + $0x130] sm:$0xff]
  %v1250 = vld [vmem:[%s3 + $0x138] sm:$0xff]
  %v1251 = vld [vmem:[%s3 + $0x140] sm:$0xff]
  %v1252 = vld [vmem:[%s3 + $0x148] sm:$0xff]
  %v1253 = vld [vmem:[%s3 + $0x150] sm:$0xff]
  %v1254 = vld [vmem:[%s3 + $0x158] sm:$0xff]
  %v1255 = vld [vmem:[%s3 + $0x160] sm:$0xff]
  %v1256 = vld [vmem:[%s3 + $0x168] sm:$0xff]
  %v1257 = vld [vmem:[%s3 + $0x170] sm:$0xff]
  %v1258 = vld [vmem:[%s3 + $0x178] sm:$0xff]
  %v1259 = vld [vmem:[%s3 + $0x180] sm:$0xff]
  %v1260 = vld [vmem:[%s3 + $0x188] sm:$0xff]
  %v1261 = vld [vmem:[%s3 + $0x190] sm:$0xff]
  %v1262 = vld [vmem:[%s3 + $0x198] sm:$0xff]
  %v1263 = vld [vmem:[%s3 + $0x1a0] sm:$0xff]
  %v1264 = vld [vmem:[%s3 + $0x1a8] sm:$0xff]
  %v1265 = vld [vmem:[%s3 + $0x1b0] sm:$0xff]
  %v1266 = vld [vmem:[%s3 + $0x1b8] sm:$0xff]
  %v1267 = vld [vmem:[%s3 + $0x1c0] sm:$0xff]
  %v1268 = vld [vmem:[%s3 + $0x1c8] sm:$0xff]
  %v1269 = vld [vmem:[%s3 + $0x1d0] sm:$0xff]
  %v1270 = vld [vmem:[%s3 + $0x1d8] sm:$0xff]
  %v1271 = vld [vmem:[%s3 + $0x1e0] sm:$0xff]
  %v1272 = vld [vmem:[%s3 + $0x1e8] sm:$0xff]
  %v1273 = vld [vmem:[%s3 + $0x1f0] sm:$0xff]
  %v1274 = vld [vmem:[%s3 + $0x1f8] sm:$0xff]
  %v1275 = vld [vmem:[%s4] sm:$0xff]
  %v1277 = vlaneseq
  %v1278 = vshrl.u32 %v1277, 7
  %v1279 = vsub.s32 0, %v1278
  %v1280 = vrot.slane %v1275, %v1279
  %v1281 = vlaneseq
  %v1282 = vshrl.u32 %v1281, 7
  %v1283 = vsub.s32 1, %v1282
  %v1284 = vrot.slane %v1275, %v1283
  %v1285 = vlaneseq
  %v1286 = vshrl.u32 %v1285, 7
  %v1287 = vsub.s32 2, %v1286
  %v1288 = vrot.slane %v1275, %v1287
  %v1289 = vlaneseq
  %v1290 = vshrl.u32 %v1289, 7
  %v1291 = vsub.s32 3, %v1290
  %v1292 = vrot.slane %v1275, %v1291
  %v1293 = vlaneseq
  %v1294 = vshrl.u32 %v1293, 7
  %v1295 = vsub.s32 4, %v1294
  %v1296 = vrot.slane %v1275, %v1295
  %v1297 = vlaneseq
  %v1298 = vshrl.u32 %v1297, 7
  %v1299 = vsub.s32 5, %v1298
  %v1300 = vrot.slane %v1275, %v1299
  %v1301 = vlaneseq
  %v1302 = vshrl.u32 %v1301, 7
  %v1303 = vsub.s32 6, %v1302
  %v1304 = vrot.slane %v1275, %v1303
  %v1305 = vlaneseq
  %v1306 = vshrl.u32 %v1305, 7
  %v1307 = vsub.s32 7, %v1306
  %v1308 = vrot.slane %v1275, %v1307
  %v1325 = vunpack.c.l.b16 %v1203
  %v1326 = vunpack.c.l.b16 %v1204
  %v1327 = vunpack.c.l.b16 %v1205
  %v1328 = vunpack.c.l.b16 %v1206
  %v1329 = vunpack.c.l.b16 %v1207
  %v1330 = vunpack.c.l.b16 %v1208
  %v1331 = vunpack.c.l.b16 %v1209
  %v1332 = vunpack.c.l.b16 %v1210
  %vm1333 = vcmask 1041409
  %v1334 = vsel %vm1333, %v1326, %v1325
  %vm1335 = vcmask 1042434
  %v1336 = vsel %vm1335, %v1327, %v1334
  %vm1337 = vcmask 1043459
  %v1338 = vsel %vm1337, %v1328, %v1336
  %vm1339 = vcmask 1044484
  %v1340 = vsel %vm1339, %v1329, %v1338
  %vm1341 = vcmask 1045509
  %v1342 = vsel %vm1341, %v1330, %v1340
  %vm1343 = vcmask 1046534
  %v1344 = vsel %vm1343, %v1331, %v1342
  %vm1345 = vcmask 1047559
  %v1346 = vsel %vm1345, %v1332, %v1344
  %v1347 = vpack.c.b16 %v1346, %v1346
  %v1413 = vunpack.c.l.b16 %v1211
  %v1414 = vunpack.c.h.b16 %v1211
  %v1415 = vunpack.c.l.b16 %v1212
  %v1416 = vunpack.c.h.b16 %v1212
  %v1417 = vunpack.c.l.b16 %v1213
  %v1418 = vunpack.c.h.b16 %v1213
  %v1419 = vunpack.c.l.b16 %v1214
  %v1420 = vunpack.c.h.b16 %v1214
  %v1421 = vunpack.c.l.b16 %v1215
  %v1422 = vunpack.c.h.b16 %v1215
  %v1423 = vunpack.c.l.b16 %v1216
  %v1424 = vunpack.c.h.b16 %v1216
  %v1425 = vunpack.c.l.b16 %v1217
  %v1426 = vunpack.c.h.b16 %v1217
  %v1427 = vunpack.c.l.b16 %v1218
  %v1428 = vunpack.c.h.b16 %v1218
  %v1429 = vunpack.c.l.b16 %v1219
  %v1430 = vunpack.c.h.b16 %v1219
  %v1431 = vunpack.c.l.b16 %v1220
  %v1432 = vunpack.c.h.b16 %v1220
  %v1433 = vunpack.c.l.b16 %v1221
  %v1434 = vunpack.c.h.b16 %v1221
  %v1435 = vunpack.c.l.b16 %v1222
  %v1436 = vunpack.c.h.b16 %v1222
  %v1437 = vunpack.c.l.b16 %v1223
  %v1438 = vunpack.c.h.b16 %v1223
  %v1439 = vunpack.c.l.b16 %v1224
  %v1440 = vunpack.c.h.b16 %v1224
  %v1441 = vunpack.c.l.b16 %v1225
  %v1442 = vunpack.c.h.b16 %v1225
  %v1443 = vunpack.c.l.b16 %v1226
  %v1444 = vunpack.c.h.b16 %v1226
  %v1445 = vunpack.c.l.b16 %v1227
  %v1446 = vunpack.c.h.b16 %v1227
  %v1447 = vunpack.c.l.b16 %v1228
  %v1448 = vunpack.c.h.b16 %v1228
  %v1449 = vunpack.c.l.b16 %v1229
  %v1450 = vunpack.c.h.b16 %v1229
  %v1451 = vunpack.c.l.b16 %v1230
  %v1452 = vunpack.c.h.b16 %v1230
  %v1453 = vunpack.c.l.b16 %v1231
  %v1454 = vunpack.c.h.b16 %v1231
  %v1455 = vunpack.c.l.b16 %v1232
  %v1456 = vunpack.c.h.b16 %v1232
  %v1457 = vunpack.c.l.b16 %v1233
  %v1458 = vunpack.c.h.b16 %v1233
  %v1459 = vunpack.c.l.b16 %v1234
  %v1460 = vunpack.c.h.b16 %v1234
  %v1461 = vunpack.c.l.b16 %v1235
  %v1462 = vunpack.c.h.b16 %v1235
  %v1463 = vunpack.c.l.b16 %v1236
  %v1464 = vunpack.c.h.b16 %v1236
  %v1465 = vunpack.c.l.b16 %v1237
  %v1466 = vunpack.c.h.b16 %v1237
  %v1467 = vunpack.c.l.b16 %v1238
  %v1468 = vunpack.c.h.b16 %v1238
  %v1469 = vunpack.c.l.b16 %v1239
  %v1470 = vunpack.c.h.b16 %v1239
  %v1471 = vunpack.c.l.b16 %v1240
  %v1472 = vunpack.c.h.b16 %v1240
  %v1473 = vunpack.c.l.b16 %v1241
  %v1474 = vunpack.c.h.b16 %v1241
  %v1475 = vunpack.c.l.b16 %v1242
  %v1476 = vunpack.c.h.b16 %v1242
  %v1477 = vunpack.c.l.b16 %v1243
  %v1478 = vunpack.c.h.b16 %v1243
  %v1479 = vunpack.c.l.b16 %v1244
  %v1480 = vunpack.c.h.b16 %v1244
  %v1481 = vunpack.c.l.b16 %v1245
  %v1482 = vunpack.c.h.b16 %v1245
  %v1483 = vunpack.c.l.b16 %v1246
  %v1484 = vunpack.c.h.b16 %v1246
  %v1485 = vunpack.c.l.b16 %v1247
  %v1486 = vunpack.c.h.b16 %v1247
  %v1487 = vunpack.c.l.b16 %v1248
  %v1488 = vunpack.c.h.b16 %v1248
  %v1489 = vunpack.c.l.b16 %v1249
  %v1490 = vunpack.c.h.b16 %v1249
  %v1491 = vunpack.c.l.b16 %v1250
  %v1492 = vunpack.c.h.b16 %v1250
  %v1493 = vunpack.c.l.b16 %v1251
  %v1494 = vunpack.c.h.b16 %v1251
  %v1495 = vunpack.c.l.b16 %v1252
  %v1496 = vunpack.c.h.b16 %v1252
  %v1497 = vunpack.c.l.b16 %v1253
  %v1498 = vunpack.c.h.b16 %v1253
  %v1499 = vunpack.c.l.b16 %v1254
  %v1500 = vunpack.c.h.b16 %v1254
  %v1501 = vunpack.c.l.b16 %v1255
  %v1502 = vunpack.c.h.b16 %v1255
  %v1503 = vunpack.c.l.b16 %v1256
  %v1504 = vunpack.c.h.b16 %v1256
  %v1505 = vunpack.c.l.b16 %v1257
  %v1506 = vunpack.c.h.b16 %v1257
  %v1507 = vunpack.c.l.b16 %v1258
  %v1508 = vunpack.c.h.b16 %v1258
  %v1509 = vunpack.c.l.b16 %v1259
  %v1510 = vunpack.c.h.b16 %v1259
  %v1511 = vunpack.c.l.b16 %v1260
  %v1512 = vunpack.c.h.b16 %v1260
  %v1513 = vunpack.c.l.b16 %v1261
  %v1514 = vunpack.c.h.b16 %v1261
  %v1515 = vunpack.c.l.b16 %v1262
  %v1516 = vunpack.c.h.b16 %v1262
  %v1517 = vunpack.c.l.b16 %v1263
  %v1518 = vunpack.c.h.b16 %v1263
  %v1519 = vunpack.c.l.b16 %v1264
  %v1520 = vunpack.c.h.b16 %v1264
  %v1521 = vunpack.c.l.b16 %v1265
  %v1522 = vunpack.c.h.b16 %v1265
  %v1523 = vunpack.c.l.b16 %v1266
  %v1524 = vunpack.c.h.b16 %v1266
  %v1525 = vunpack.c.l.b16 %v1267
  %v1526 = vunpack.c.h.b16 %v1267
  %v1527 = vunpack.c.l.b16 %v1268
  %v1528 = vunpack.c.h.b16 %v1268
  %v1529 = vunpack.c.l.b16 %v1269
  %v1530 = vunpack.c.h.b16 %v1269
  %v1531 = vunpack.c.l.b16 %v1270
  %v1532 = vunpack.c.h.b16 %v1270
  %v1533 = vunpack.c.l.b16 %v1271
  %v1534 = vunpack.c.h.b16 %v1271
  %v1535 = vunpack.c.l.b16 %v1272
  %v1536 = vunpack.c.h.b16 %v1272
  %v1537 = vunpack.c.l.b16 %v1273
  %v1538 = vunpack.c.h.b16 %v1273
  %v1539 = vunpack.c.l.b16 %v1274
  %v1540 = vunpack.c.h.b16 %v1274
  %v1541 = vpack.c.b16 %v1421, %v1413
  %v1542 = vpack.c.b16 %v1422, %v1414
  %v1543 = vpack.c.b16 %v1423, %v1415
  %v1544 = vpack.c.b16 %v1424, %v1416
  %v1545 = vpack.c.b16 %v1425, %v1417
  %v1546 = vpack.c.b16 %v1426, %v1418
  %v1547 = vpack.c.b16 %v1427, %v1419
  %v1548 = vpack.c.b16 %v1428, %v1420
  %v1549 = vpack.c.b16 %v1437, %v1429
  %v1550 = vpack.c.b16 %v1438, %v1430
  %v1551 = vpack.c.b16 %v1439, %v1431
  %v1552 = vpack.c.b16 %v1440, %v1432
  %v1553 = vpack.c.b16 %v1441, %v1433
  %v1554 = vpack.c.b16 %v1442, %v1434
  %v1555 = vpack.c.b16 %v1443, %v1435
  %v1556 = vpack.c.b16 %v1444, %v1436
  %v1557 = vpack.c.b16 %v1453, %v1445
  %v1558 = vpack.c.b16 %v1454, %v1446
  %v1559 = vpack.c.b16 %v1455, %v1447
  %v1560 = vpack.c.b16 %v1456, %v1448
  %v1561 = vpack.c.b16 %v1457, %v1449
  %v1562 = vpack.c.b16 %v1458, %v1450
  %v1563 = vpack.c.b16 %v1459, %v1451
  %v1564 = vpack.c.b16 %v1460, %v1452
  %v1565 = vpack.c.b16 %v1469, %v1461
  %v1566 = vpack.c.b16 %v1470, %v1462
  %v1567 = vpack.c.b16 %v1471, %v1463
  %v1568 = vpack.c.b16 %v1472, %v1464
  %v1569 = vpack.c.b16 %v1473, %v1465
  %v1570 = vpack.c.b16 %v1474, %v1466
  %v1571 = vpack.c.b16 %v1475, %v1467
  %v1572 = vpack.c.b16 %v1476, %v1468
  %v1573 = vpack.c.b16 %v1485, %v1477
  %v1574 = vpack.c.b16 %v1486, %v1478
  %v1575 = vpack.c.b16 %v1487, %v1479
  %v1576 = vpack.c.b16 %v1488, %v1480
  %v1577 = vpack.c.b16 %v1489, %v1481
  %v1578 = vpack.c.b16 %v1490, %v1482
  %v1579 = vpack.c.b16 %v1491, %v1483
  %v1580 = vpack.c.b16 %v1492, %v1484
  %v1581 = vpack.c.b16 %v1501, %v1493
  %v1582 = vpack.c.b16 %v1502, %v1494
  %v1583 = vpack.c.b16 %v1503, %v1495
  %v1584 = vpack.c.b16 %v1504, %v1496
  %v1585 = vpack.c.b16 %v1505, %v1497
  %v1586 = vpack.c.b16 %v1506, %v1498
  %v1587 = vpack.c.b16 %v1507, %v1499
  %v1588 = vpack.c.b16 %v1508, %v1500
  %v1589 = vpack.c.b16 %v1517, %v1509
  %v1590 = vpack.c.b16 %v1518, %v1510
  %v1591 = vpack.c.b16 %v1519, %v1511
  %v1592 = vpack.c.b16 %v1520, %v1512
  %v1593 = vpack.c.b16 %v1521, %v1513
  %v1594 = vpack.c.b16 %v1522, %v1514
  %v1595 = vpack.c.b16 %v1523, %v1515
  %v1596 = vpack.c.b16 %v1524, %v1516
  %v1597 = vpack.c.b16 %v1533, %v1525
  %v1598 = vpack.c.b16 %v1534, %v1526
  %v1599 = vpack.c.b16 %v1535, %v1527
  %v1600 = vpack.c.b16 %v1536, %v1528
  %v1601 = vpack.c.b16 %v1537, %v1529
  %v1602 = vpack.c.b16 %v1538, %v1530
  %v1603 = vpack.c.b16 %v1539, %v1531
  %v1604 = vpack.c.b16 %v1540, %v1532
  %1669 = vmatprep.subr.bf16.mxu0 %v1542
  %1670 = vmatpush1.bf16.msra.mxu0 %v1541
  %1671 = vmatprep.subr.bf16.mxu0 %v1550
  %1672 = vmatpush1.bf16.msra.mxu0 %v1549
  %1673 = vmatprep.subr.bf16.mxu0 %v1558
  %1674 = vmatpush1.bf16.msra.mxu0 %v1557
  %1675 = vmatprep.subr.bf16.mxu0 %v1566
  %1676 = vmatpush1.bf16.msra.mxu0 %v1565
  %1677 = vmatprep.subr.bf16.mxu0 %v1574
  %1678 = vmatpush1.bf16.msra.mxu0 %v1573
  %1679 = vmatprep.subr.bf16.mxu0 %v1582
  %1680 = vmatpush1.bf16.msra.mxu0 %v1581
  %1681 = vmatprep.subr.bf16.mxu0 %v1590
  %1682 = vmatpush1.bf16.msra.mxu0 %v1589
  %1683 = vmatprep.subr.bf16.mxu0 %v1598
  %1684 = vmatpush1.bf16.msra.mxu0 %v1597
  %1685 = vmatprep.subr.bf16.mxu0 0
  %1686 = vmatpush1.bf16.msra.mxu0 0
  %1687 = vmatprep.subr.bf16.mxu0 0
  %1688 = vmatpush1.bf16.msra.mxu0 0
  %1689 = vmatprep.subr.bf16.mxu0 0
  %1690 = vmatpush1.bf16.msra.mxu0 0
  %1691 = vmatprep.subr.bf16.mxu0 0
  %1692 = vmatpush1.bf16.msra.mxu0 0
  %1693 = vmatprep.subr.bf16.mxu0 0
  %1694 = vmatpush1.bf16.msra.mxu0 0
  %1695 = vmatprep.subr.bf16.mxu0 0
  %1696 = vmatpush1.bf16.msra.mxu0 0
  %1697 = vmatprep.subr.bf16.mxu0 0
  %1698 = vmatpush1.bf16.msra.mxu0 0
  %1699 = vmatprep.subr.bf16.mxu0 0
  %1700 = vmatpush1.bf16.msra.mxu0 0
  %1701 = vmatprep.mubr.bf16.mxu0 0
  %1702 = vmatmul.mubr.bf16.gmra.mrb[0].mxu0 %v1347
  %v1703 = vpop.f32.mrb[0].mxu0
  %v1704 = vadd.f32 %v1280, %v1703
  %v1705 = vpop.f32.mrb[0].mxu0
  %v1706 = vadd.f32 %v1284, %v1705
  %v1707 = vpop.f32.mrb[0].mxu0
  %v1708 = vpop.f32.mrb[0].mxu0
  %1709 = vdwg.mxu0
  %1710 = vmatprep.subr.bf16.mxu0 %v1544
  %1711 = vmatpush1.bf16.msra.mxu0 %v1543
  %1712 = vmatprep.subr.bf16.mxu0 %v1552
  %1713 = vmatpush1.bf16.msra.mxu0 %v1551
  %1714 = vmatprep.subr.bf16.mxu0 %v1560
  %1715 = vmatpush1.bf16.msra.mxu0 %v1559
  %1716 = vmatprep.subr.bf16.mxu0 %v1568
  %1717 = vmatpush1.bf16.msra.mxu0 %v1567
  %1718 = vmatprep.subr.bf16.mxu0 %v1576
  %1719 = vmatpush1.bf16.msra.mxu0 %v1575
  %1720 = vmatprep.subr.bf16.mxu0 %v1584
  %1721 = vmatpush1.bf16.msra.mxu0 %v1583
  %1722 = vmatprep.subr.bf16.mxu0 %v1592
  %1723 = vmatpush1.bf16.msra.mxu0 %v1591
  %1724 = vmatprep.subr.bf16.mxu0 %v1600
  %1725 = vmatpush1.bf16.msra.mxu0 %v1599
  %1726 = vmatprep.subr.bf16.mxu0 0
  %1727 = vmatpush1.bf16.msra.mxu0 0
  %1728 = vmatprep.subr.bf16.mxu0 0
  %1729 = vmatpush1.bf16.msra.mxu0 0
  %1730 = vmatprep.subr.bf16.mxu0 0
  %1731 = vmatpush1.bf16.msra.mxu0 0
  %1732 = vmatprep.subr.bf16.mxu0 0
  %1733 = vmatpush1.bf16.msra.mxu0 0
  %1734 = vmatprep.subr.bf16.mxu0 0
  %1735 = vmatpush1.bf16.msra.mxu0 0
  %1736 = vmatprep.subr.bf16.mxu0 0
  %1737 = vmatpush1.bf16.msra.mxu0 0
  %1738 = vmatprep.subr.bf16.mxu0 0
  %1739 = vmatpush1.bf16.msra.mxu0 0
  %1740 = vmatprep.subr.bf16.mxu0 0
  %1741 = vmatpush1.bf16.msra.mxu0 0
  %1742 = vmatprep.mubr.bf16.mxu0 0
  %1743 = vmatmul.mubr.bf16.gmra.mrb[0].mxu0 %v1347
  %v1744 = vpop.f32.mrb[0].mxu0
  %v1745 = vadd.f32 %v1288, %v1744
  %v1746 = vpop.f32.mrb[0].mxu0
  %v1747 = vadd.f32 %v1292, %v1746
  %v1748 = vpop.f32.mrb[0].mxu0
  %v1749 = vpop.f32.mrb[0].mxu0
  %1750 = vdwg.mxu0
  %1751 = vmatprep.subr.bf16.mxu0 %v1546
  %1752 = vmatpush1.bf16.msra.mxu0 %v1545
  %1753 = vmatprep.subr.bf16.mxu0 %v1554
  %1754 = vmatpush1.bf16.msra.mxu0 %v1553
  %1755 = vmatprep.subr.bf16.mxu0 %v1562
  %1756 = vmatpush1.bf16.msra.mxu0 %v1561
  %1757 = vmatprep.subr.bf16.mxu0 %v1570
  %1758 = vmatpush1.bf16.msra.mxu0 %v1569
  %1759 = vmatprep.subr.bf16.mxu0 %v1578
  %1760 = vmatpush1.bf16.msra.mxu0 %v1577
  %1761 = vmatprep.subr.bf16.mxu0 %v1586
  %1762 = vmatpush1.bf16.msra.mxu0 %v1585
  %1763 = vmatprep.subr.bf16.mxu0 %v1594
  %1764 = vmatpush1.bf16.msra.mxu0 %v1593
  %1765 = vmatprep.subr.bf16.mxu0 %v1602
  %1766 = vmatpush1.bf16.msra.mxu0 %v1601
  %1767 = vmatprep.subr.bf16.mxu0 0
  %1768 = vmatpush1.bf16.msra.mxu0 0
  %1769 = vmatprep.subr.bf16.mxu0 0
  %1770 = vmatpush1.bf16.msra.mxu0 0
  %1771 = vmatprep.subr.bf16.mxu0 0
  %1772 = vmatpush1.bf16.msra.mxu0 0
  %1773 = vmatprep.subr.bf16.mxu0 0
  %1774 = vmatpush1.bf16.msra.mxu0 0
  %1775 = vmatprep.subr.bf16.mxu0 0
  %1776 = vmatpush1.bf16.msra.mxu0 0
  %1777 = vmatprep.subr.bf16.mxu0 0
  %1778 = vmatpush1.bf16.msra.mxu0 0
  %1779 = vmatprep.subr.bf16.mxu0 0
  %1780 = vmatpush1.bf16.msra.mxu0 0
  %1781 = vmatprep.subr.bf16.mxu0 0
  %1782 = vmatpush1.bf16.msra.mxu0 0
  %1783 = vmatprep.mubr.bf16.mxu0 0
  %1784 = vmatmul.mubr.bf16.gmra.mrb[0].mxu0 %v1347
  %v1785 = vpop.f32.mrb[0].mxu0
  %v1786 = vadd.f32 %v1296, %v1785
  %v1787 = vpop.f32.mrb[0].mxu0
  %v1788 = vadd.f32 %v1300, %v1787
  %v1789 = vpop.f32.mrb[0].mxu0
  %v1790 = vpop.f32.mrb[0].mxu0
  %1791 = vdwg.mxu0
  %1792 = vmatprep.subr.bf16.mxu0 %v1548
  %1793 = vmatpush1.bf16.msra.mxu0 %v1547
  %1794 = vmatprep.subr.bf16.mxu0 %v1556
  %1795 = vmatpush1.bf16.msra.mxu0 %v1555
  %1796 = vmatprep.subr.bf16.mxu0 %v1564
  %1797 = vmatpush1.bf16.msra.mxu0 %v1563
  %1798 = vmatprep.subr.bf16.mxu0 %v1572
  %1799 = vmatpush1.bf16.msra.mxu0 %v1571
  %1800 = vmatprep.subr.bf16.mxu0 %v1580
  %1801 = vmatpush1.bf16.msra.mxu0 %v1579
  %1802 = vmatprep.subr.bf16.mxu0 %v1588
  %1803 = vmatpush1.bf16.msra.mxu0 %v1587
  %1804 = vmatprep.subr.bf16.mxu0 %v1596
  %1805 = vmatpush1.bf16.msra.mxu0 %v1595
  %1806 = vmatprep.subr.bf16.mxu0 %v1604
  %1807 = vmatpush1.bf16.msra.mxu0 %v1603
  %1808 = vmatprep.subr.bf16.mxu0 0
  %1809 = vmatpush1.bf16.msra.mxu0 0
  %1810 = vmatprep.subr.bf16.mxu0 0
  %1811 = vmatpush1.bf16.msra.mxu0 0
  %1812 = vmatprep.subr.bf16.mxu0 0
  %1813 = vmatpush1.bf16.msra.mxu0 0
  %1814 = vmatprep.subr.bf16.mxu0 0
  %1815 = vmatpush1.bf16.msra.mxu0 0
  %1816 = vmatprep.subr.bf16.mxu0 0
  %1817 = vmatpush1.bf16.msra.mxu0 0
  %1818 = vmatprep.subr.bf16.mxu0 0
  %1819 = vmatpush1.bf16.msra.mxu0 0
  %1820 = vmatprep.subr.bf16.mxu0 0
  %1821 = vmatpush1.bf16.msra.mxu0 0
  %1822 = vmatprep.subr.bf16.mxu0 0
  %1823 = vmatpush1.bf16.msra.mxu0 0
  %1824 = vmatprep.mubr.bf16.mxu0 0
  %1825 = vmatmul.mubr.bf16.gmra.mrb[0].mxu0 %v1347
  %v1826 = vpop.f32.mrb[0].mxu0
  %v1827 = vadd.f32 %v1304, %v1826
  %v1828 = vpop.f32.mrb[0].mxu0
  %v1829 = vadd.f32 %v1308, %v1828
  %v1830 = vpop.f32.mrb[0].mxu0
  %v1831 = vpop.f32.mrb[0].mxu0
  %1832 = vdwg.mxu0
  %v1833 = vmax.f32 %v1704, 0.0
  %v1834 = vmax.f32 %v1706, 0.0
  %v1835 = vmax.f32 %v1745, 0.0
  %v1836 = vmax.f32 %v1747, 0.0
  %v1837 = vmax.f32 %v1786, 0.0
  %v1838 = vmax.f32 %v1788, 0.0
  %v1839 = vmax.f32 %v1827, 0.0
  %v1840 = vmax.f32 %v1829, 0.0
  %v1841 = vpack.c.bf16 %v1833, %v1833
  %v1842 = vpack.c.bf16 %v1834, %v1834
  %v1843 = vpack.c.bf16 %v1835, %v1835
  %v1844 = vpack.c.bf16 %v1836, %v1836
  %v1845 = vpack.c.bf16 %v1837, %v1837
  %v1846 = vpack.c.bf16 %v1838, %v1838
  %v1847 = vpack.c.bf16 %v1839, %v1839
  %v1848 = vpack.c.bf16 %v1840, %v1840
  %v1849 = vld [vmem:[%s5] sm:$0xf]
  %v1850 = vld [vmem:[%s5 + $0x4] sm:$0xf]
  %v1851 = vld [vmem:[%s5 + $0x8] sm:$0xf]
  %v1852 = vld [vmem:[%s5 + $0xc] sm:$0xf]
  %v1853 = vld [vmem:[%s5 + $0x10] sm:$0xf]
  %v1854 = vld [vmem:[%s5 + $0x14] sm:$0xf]
  %v1855 = vld [vmem:[%s5 + $0x18] sm:$0xf]
  %v1856 = vld [vmem:[%s5 + $0x1c] sm:$0xf]
  %v1857 = vld [vmem:[%s5 + $0x20] sm:$0xf]
  %v1858 = vld [vmem:[%s5 + $0x24] sm:$0xf]
  %v1859 = vld [vmem:[%s5 + $0x28] sm:$0xf]
  %v1860 = vld [vmem:[%s5 + $0x2c] sm:$0xf]
  %v1861 = vld [vmem:[%s5 + $0x30] sm:$0xf]
  %v1862 = vld [vmem:[%s5 + $0x34] sm:$0xf]
  %v1863 = vld [vmem:[%s5 + $0x38] sm:$0xf]
  %v1864 = vld [vmem:[%s5 + $0x3c] sm:$0xf]
  %v1865 = vld [vmem:[%s5 + $0x40] sm:$0xf]
  %v1866 = vld [vmem:[%s5 + $0x44] sm:$0xf]
  %v1867 = vld [vmem:[%s5 + $0x48] sm:$0xf]
  %v1868 = vld [vmem:[%s5 + $0x4c] sm:$0xf]
  %v1869 = vld [vmem:[%s5 + $0x50] sm:$0xf]
  %v1870 = vld [vmem:[%s5 + $0x54] sm:$0xf]
  %v1871 = vld [vmem:[%s5 + $0x58] sm:$0xf]
  %v1872 = vld [vmem:[%s5 + $0x5c] sm:$0xf]
  %v1873 = vld [vmem:[%s5 + $0x60] sm:$0xf]
  %v1874 = vld [vmem:[%s5 + $0x64] sm:$0xf]
  %v1875 = vld [vmem:[%s5 + $0x68] sm:$0xf]
  %v1876 = vld [vmem:[%s5 + $0x6c] sm:$0xf]
  %v1877 = vld [vmem:[%s5 + $0x70] sm:$0xf]
  %v1878 = vld [vmem:[%s5 + $0x74] sm:$0xf]
  %v1879 = vld [vmem:[%s5 + $0x78] sm:$0xf]
  %v1880 = vld [vmem:[%s5 + $0x7c] sm:$0xf]
  %v1881 = vld [vmem:[%s5 + $0x80] sm:$0xf]
  %v1882 = vld [vmem:[%s5 + $0x84] sm:$0xf]
  %v1883 = vld [vmem:[%s5 + $0x88] sm:$0xf]
  %v1884 = vld [vmem:[%s5 + $0x8c] sm:$0xf]
  %v1885 = vld [vmem:[%s5 + $0x90] sm:$0xf]
  %v1886 = vld [vmem:[%s5 + $0x94] sm:$0xf]
  %v1887 = vld [vmem:[%s5 + $0x98] sm:$0xf]
  %v1888 = vld [vmem:[%s5 + $0x9c] sm:$0xf]
  %v1889 = vld [vmem:[%s5 + $0xa0] sm:$0xf]
  %v1890 = vld [vmem:[%s5 + $0xa4] sm:$0xf]
  %v1891 = vld [vmem:[%s5 + $0xa8] sm:$0xf]
  %v1892 = vld [vmem:[%s5 + $0xac] sm:$0xf]
  %v1893 = vld [vmem:[%s5 + $0xb0] sm:$0xf]
  %v1894 = vld [vmem:[%s5 + $0xb4] sm:$0xf]
  %v1895 = vld [vmem:[%s5 + $0xb8] sm:$0xf]
  %v1896 = vld [vmem:[%s5 + $0xbc] sm:$0xf]
  %v1897 = vld [vmem:[%s5 + $0xc0] sm:$0xf]
  %v1898 = vld [vmem:[%s5 + $0xc4] sm:$0xf]
  %v1899 = vld [vmem:[%s5 + $0xc8] sm:$0xf]
  %v1900 = vld [vmem:[%s5 + $0xcc] sm:$0xf]
  %v1901 = vld [vmem:[%s5 + $0xd0] sm:$0xf]
  %v1902 = vld [vmem:[%s5 + $0xd4] sm:$0xf]
  %v1903 = vld [vmem:[%s5 + $0xd8] sm:$0xf]
  %v1904 = vld [vmem:[%s5 + $0xdc] sm:$0xf]
  %v1905 = vld [vmem:[%s5 + $0xe0] sm:$0xf]
  %v1906 = vld [vmem:[%s5 + $0xe4] sm:$0xf]
  %v1907 = vld [vmem:[%s5 + $0xe8] sm:$0xf]
  %v1908 = vld [vmem:[%s5 + $0xec] sm:$0xf]
  %v1909 = vld [vmem:[%s5 + $0xf0] sm:$0xf]
  %v1910 = vld [vmem:[%s5 + $0xf4] sm:$0xf]
  %v1911 = vld [vmem:[%s5 + $0xf8] sm:$0xf]
  %v1912 = vld [vmem:[%s5 + $0xfc] sm:$0xf]
  %v1913 = vld [vmem:[%s5 + $0x100] sm:$0xf]
  %v1914 = vld [vmem:[%s5 + $0x104] sm:$0xf]
  %v1915 = vld [vmem:[%s5 + $0x108] sm:$0xf]
  %v1916 = vld [vmem:[%s5 + $0x10c] sm:$0xf]
  %v1917 = vld [vmem:[%s5 + $0x110] sm:$0xf]
  %v1918 = vld [vmem:[%s5 + $0x114] sm:$0xf]
  %v1919 = vld [vmem:[%s5 + $0x118] sm:$0xf]
  %v1920 = vld [vmem:[%s5 + $0x11c] sm:$0xf]
  %v1921 = vld [vmem:[%s5 + $0x120] sm:$0xf]
  %v1922 = vld [vmem:[%s5 + $0x124] sm:$0xf]
  %v1923 = vld [vmem:[%s5 + $0x128] sm:$0xf]
  %v1924 = vld [vmem:[%s5 + $0x12c] sm:$0xf]
  %v1925 = vld [vmem:[%s5 + $0x130] sm:$0xf]
  %v1926 = vld [vmem:[%s5 + $0x134] sm:$0xf]
  %v1927 = vld [vmem:[%s5 + $0x138] sm:$0xf]
  %v1928 = vld [vmem:[%s5 + $0x13c] sm:$0xf]
  %v1929 = vld [vmem:[%s5 + $0x140] sm:$0xf]
  %v1930 = vld [vmem:[%s5 + $0x144] sm:$0xf]
  %v1931 = vld [vmem:[%s5 + $0x148] sm:$0xf]
  %v1932 = vld [vmem:[%s5 + $0x14c] sm:$0xf]
  %v1933 = vld [vmem:[%s5 + $0x150] sm:$0xf]
  %v1934 = vld [vmem:[%s5 + $0x154] sm:$0xf]
  %v1935 = vld [vmem:[%s5 + $0x158] sm:$0xf]
  %v1936 = vld [vmem:[%s5 + $0x15c] sm:$0xf]
  %v1937 = vld [vmem:[%s5 + $0x160] sm:$0xf]
  %v1938 = vld [vmem:[%s5 + $0x164] sm:$0xf]
  %v1939 = vld [vmem:[%s5 + $0x168] sm:$0xf]
  %v1940 = vld [vmem:[%s5 + $0x16c] sm:$0xf]
  %v1941 = vld [vmem:[%s5 + $0x170] sm:$0xf]
  %v1942 = vld [vmem:[%s5 + $0x174] sm:$0xf]
  %v1943 = vld [vmem:[%s5 + $0x178] sm:$0xf]
  %v1944 = vld [vmem:[%s5 + $0x17c] sm:$0xf]
  %v1945 = vld [vmem:[%s5 + $0x180] sm:$0xf]
  %v1946 = vld [vmem:[%s5 + $0x184] sm:$0xf]
  %v1947 = vld [vmem:[%s5 + $0x188] sm:$0xf]
  %v1948 = vld [vmem:[%s5 + $0x18c] sm:$0xf]
  %v1949 = vld [vmem:[%s5 + $0x190] sm:$0xf]
  %v1950 = vld [vmem:[%s5 + $0x194] sm:$0xf]
  %v1951 = vld [vmem:[%s5 + $0x198] sm:$0xf]
  %v1952 = vld [vmem:[%s5 + $0x19c] sm:$0xf]
  %v1953 = vld [vmem:[%s5 + $0x1a0] sm:$0xf]
  %v1954 = vld [vmem:[%s5 + $0x1a4] sm:$0xf]
  %v1955 = vld [vmem:[%s5 + $0x1a8] sm:$0xf]
  %v1956 = vld [vmem:[%s5 + $0x1ac] sm:$0xf]
  %v1957 = vld [vmem:[%s5 + $0x1b0] sm:$0xf]
  %v1958 = vld [vmem:[%s5 + $0x1b4] sm:$0xf]
  %v1959 = vld [vmem:[%s5 + $0x1b8] sm:$0xf]
  %v1960 = vld [vmem:[%s5 + $0x1bc] sm:$0xf]
  %v1961 = vld [vmem:[%s5 + $0x1c0] sm:$0xf]
  %v1962 = vld [vmem:[%s5 + $0x1c4] sm:$0xf]
  %v1963 = vld [vmem:[%s5 + $0x1c8] sm:$0xf]
  %v1964 = vld [vmem:[%s5 + $0x1cc] sm:$0xf]
  %v1965 = vld [vmem:[%s5 + $0x1d0] sm:$0xf]
  %v1966 = vld [vmem:[%s5 + $0x1d4] sm:$0xf]
  %v1967 = vld [vmem:[%s5 + $0x1d8] sm:$0xf]
  %v1968 = vld [vmem:[%s5 + $0x1dc] sm:$0xf]
  %v1969 = vld [vmem:[%s5 + $0x1e0] sm:$0xf]
  %v1970 = vld [vmem:[%s5 + $0x1e4] sm:$0xf]
  %v1971 = vld [vmem:[%s5 + $0x1e8] sm:$0xf]
  %v1972 = vld [vmem:[%s5 + $0x1ec] sm:$0xf]
  %v1973 = vld [vmem:[%s5 + $0x1f0] sm:$0xf]
  %v1974 = vld [vmem:[%s5 + $0x1f4] sm:$0xf]
  %v1975 = vld [vmem:[%s5 + $0x1f8] sm:$0xf]
  %v1976 = vld [vmem:[%s5 + $0x1fc] sm:$0xf]
  %v1977 = vld [vmem:[%s6] sm:$0x1]
  %v1979 = vlaneseq
  %v1980 = vshrl.u32 %v1979, 7
  %v1981 = vsub.s32 0, %v1980
  %v1982 = vrot.slane %v1977, %v1981
  %v2112 = vunpack.c.l.b16 %v1849
  %v2113 = vunpack.c.l.b16 %v1850
  %v2114 = vunpack.c.l.b16 %v1851
  %v2115 = vunpack.c.l.b16 %v1852
  %v2116 = vunpack.c.l.b16 %v1853
  %v2117 = vunpack.c.l.b16 %v1854
  %v2118 = vunpack.c.l.b16 %v1855
  %v2119 = vunpack.c.l.b16 %v1856
  %v2120 = vunpack.c.l.b16 %v1857
  %v2121 = vunpack.c.l.b16 %v1858
  %v2122 = vunpack.c.l.b16 %v1859
  %v2123 = vunpack.c.l.b16 %v1860
  %v2124 = vunpack.c.l.b16 %v1861
  %v2125 = vunpack.c.l.b16 %v1862
  %v2126 = vunpack.c.l.b16 %v1863
  %v2127 = vunpack.c.l.b16 %v1864
  %v2128 = vunpack.c.l.b16 %v1865
  %v2129 = vunpack.c.l.b16 %v1866
  %v2130 = vunpack.c.l.b16 %v1867
  %v2131 = vunpack.c.l.b16 %v1868
  %v2132 = vunpack.c.l.b16 %v1869
  %v2133 = vunpack.c.l.b16 %v1870
  %v2134 = vunpack.c.l.b16 %v1871
  %v2135 = vunpack.c.l.b16 %v1872
  %v2136 = vunpack.c.l.b16 %v1873
  %v2137 = vunpack.c.l.b16 %v1874
  %v2138 = vunpack.c.l.b16 %v1875
  %v2139 = vunpack.c.l.b16 %v1876
  %v2140 = vunpack.c.l.b16 %v1877
  %v2141 = vunpack.c.l.b16 %v1878
  %v2142 = vunpack.c.l.b16 %v1879
  %v2143 = vunpack.c.l.b16 %v1880
  %v2144 = vunpack.c.l.b16 %v1881
  %v2145 = vunpack.c.l.b16 %v1882
  %v2146 = vunpack.c.l.b16 %v1883
  %v2147 = vunpack.c.l.b16 %v1884
  %v2148 = vunpack.c.l.b16 %v1885
  %v2149 = vunpack.c.l.b16 %v1886
  %v2150 = vunpack.c.l.b16 %v1887
  %v2151 = vunpack.c.l.b16 %v1888
  %v2152 = vunpack.c.l.b16 %v1889
  %v2153 = vunpack.c.l.b16 %v1890
  %v2154 = vunpack.c.l.b16 %v1891
  %v2155 = vunpack.c.l.b16 %v1892
  %v2156 = vunpack.c.l.b16 %v1893
  %v2157 = vunpack.c.l.b16 %v1894
  %v2158 = vunpack.c.l.b16 %v1895
  %v2159 = vunpack.c.l.b16 %v1896
  %v2160 = vunpack.c.l.b16 %v1897
  %v2161 = vunpack.c.l.b16 %v1898
  %v2162 = vunpack.c.l.b16 %v1899
  %v2163 = vunpack.c.l.b16 %v1900
  %v2164 = vunpack.c.l.b16 %v1901
  %v2165 = vunpack.c.l.b16 %v1902
  %v2166 = vunpack.c.l.b16 %v1903
  %v2167 = vunpack.c.l.b16 %v1904
  %v2168 = vunpack.c.l.b16 %v1905
  %v2169 = vunpack.c.l.b16 %v1906
  %v2170 = vunpack.c.l.b16 %v1907
  %v2171 = vunpack.c.l.b16 %v1908
  %v2172 = vunpack.c.l.b16 %v1909
  %v2173 = vunpack.c.l.b16 %v1910
  %v2174 = vunpack.c.l.b16 %v1911
  %v2175 = vunpack.c.l.b16 %v1912
  %v2176 = vunpack.c.l.b16 %v1913
  %v2177 = vunpack.c.l.b16 %v1914
  %v2178 = vunpack.c.l.b16 %v1915
  %v2179 = vunpack.c.l.b16 %v1916
  %v2180 = vunpack.c.l.b16 %v1917
  %v2181 = vunpack.c.l.b16 %v1918
  %v2182 = vunpack.c.l.b16 %v1919
  %v2183 = vunpack.c.l.b16 %v1920
  %v2184 = vunpack.c.l.b16 %v1921
  %v2185 = vunpack.c.l.b16 %v1922
  %v2186 = vunpack.c.l.b16 %v1923
  %v2187 = vunpack.c.l.b16 %v1924
  %v2188 = vunpack.c.l.b16 %v1925
  %v2189 = vunpack.c.l.b16 %v1926
  %v2190 = vunpack.c.l.b16 %v1927
  %v2191 = vunpack.c.l.b16 %v1928
  %v2192 = vunpack.c.l.b16 %v1929
  %v2193 = vunpack.c.l.b16 %v1930
  %v2194 = vunpack.c.l.b16 %v1931
  %v2195 = vunpack.c.l.b16 %v1932
  %v2196 = vunpack.c.l.b16 %v1933
  %v2197 = vunpack.c.l.b16 %v1934
  %v2198 = vunpack.c.l.b16 %v1935
  %v2199 = vunpack.c.l.b16 %v1936
  %v2200 = vunpack.c.l.b16 %v1937
  %v2201 = vunpack.c.l.b16 %v1938
  %v2202 = vunpack.c.l.b16 %v1939
  %v2203 = vunpack.c.l.b16 %v1940
  %v2204 = vunpack.c.l.b16 %v1941
  %v2205 = vunpack.c.l.b16 %v1942
  %v2206 = vunpack.c.l.b16 %v1943
  %v2207 = vunpack.c.l.b16 %v1944
  %v2208 = vunpack.c.l.b16 %v1945
  %v2209 = vunpack.c.l.b16 %v1946
  %v2210 = vunpack.c.l.b16 %v1947
  %v2211 = vunpack.c.l.b16 %v1948
  %v2212 = vunpack.c.l.b16 %v1949
  %v2213 = vunpack.c.l.b16 %v1950
  %v2214 = vunpack.c.l.b16 %v1951
  %v2215 = vunpack.c.l.b16 %v1952
  %v2216 = vunpack.c.l.b16 %v1953
  %v2217 = vunpack.c.l.b16 %v1954
  %v2218 = vunpack.c.l.b16 %v1955
  %v2219 = vunpack.c.l.b16 %v1956
  %v2220 = vunpack.c.l.b16 %v1957
  %v2221 = vunpack.c.l.b16 %v1958
  %v2222 = vunpack.c.l.b16 %v1959
  %v2223 = vunpack.c.l.b16 %v1960
  %v2224 = vunpack.c.l.b16 %v1961
  %v2225 = vunpack.c.l.b16 %v1962
  %v2226 = vunpack.c.l.b16 %v1963
  %v2227 = vunpack.c.l.b16 %v1964
  %v2228 = vunpack.c.l.b16 %v1965
  %v2229 = vunpack.c.l.b16 %v1966
  %v2230 = vunpack.c.l.b16 %v1967
  %v2231 = vunpack.c.l.b16 %v1968
  %v2232 = vunpack.c.l.b16 %v1969
  %v2233 = vunpack.c.l.b16 %v1970
  %v2234 = vunpack.c.l.b16 %v1971
  %v2235 = vunpack.c.l.b16 %v1972
  %v2236 = vunpack.c.l.b16 %v1973
  %v2237 = vunpack.c.l.b16 %v1974
  %v2238 = vunpack.c.l.b16 %v1975
  %v2239 = vunpack.c.l.b16 %v1976
  %v2240 = vpack.c.b16 %v2113, %v2112
  %v2241 = vpack.c.b16 %v2115, %v2114
  %v2242 = vpack.c.b16 %v2117, %v2116
  %v2243 = vpack.c.b16 %v2119, %v2118
  %v2244 = vpack.c.b16 %v2121, %v2120
  %v2245 = vpack.c.b16 %v2123, %v2122
  %v2246 = vpack.c.b16 %v2125, %v2124
  %v2247 = vpack.c.b16 %v2127, %v2126
  %v2248 = vpack.c.b16 %v2129, %v2128
  %v2249 = vpack.c.b16 %v2131, %v2130
  %v2250 = vpack.c.b16 %v2133, %v2132
  %v2251 = vpack.c.b16 %v2135, %v2134
  %v2252 = vpack.c.b16 %v2137, %v2136
  %v2253 = vpack.c.b16 %v2139, %v2138
  %v2254 = vpack.c.b16 %v2141, %v2140
  %v2255 = vpack.c.b16 %v2143, %v2142
  %v2256 = vpack.c.b16 %v2145, %v2144
  %v2257 = vpack.c.b16 %v2147, %v2146
  %v2258 = vpack.c.b16 %v2149, %v2148
  %v2259 = vpack.c.b16 %v2151, %v2150
  %v2260 = vpack.c.b16 %v2153, %v2152
  %v2261 = vpack.c.b16 %v2155, %v2154
  %v2262 = vpack.c.b16 %v2157, %v2156
  %v2263 = vpack.c.b16 %v2159, %v2158
  %v2264 = vpack.c.b16 %v2161, %v2160
  %v2265 = vpack.c.b16 %v2163, %v2162
  %v2266 = vpack.c.b16 %v2165, %v2164
  %v2267 = vpack.c.b16 %v2167, %v2166
  %v2268 = vpack.c.b16 %v2169, %v2168
  %v2269 = vpack.c.b16 %v2171, %v2170
  %v2270 = vpack.c.b16 %v2173, %v2172
  %v2271 = vpack.c.b16 %v2175, %v2174
  %v2272 = vpack.c.b16 %v2177, %v2176
  %v2273 = vpack.c.b16 %v2179, %v2178
  %v2274 = vpack.c.b16 %v2181, %v2180
  %v2275 = vpack.c.b16 %v2183, %v2182
  %v2276 = vpack.c.b16 %v2185, %v2184
  %v2277 = vpack.c.b16 %v2187, %v2186
  %v2278 = vpack.c.b16 %v2189, %v2188
  %v2279 = vpack.c.b16 %v2191, %v2190
  %v2280 = vpack.c.b16 %v2193, %v2192
  %v2281 = vpack.c.b16 %v2195, %v2194
  %v2282 = vpack.c.b16 %v2197, %v2196
  %v2283 = vpack.c.b16 %v2199, %v2198
  %v2284 = vpack.c.b16 %v2201, %v2200
  %v2285 = vpack.c.b16 %v2203, %v2202
  %v2286 = vpack.c.b16 %v2205, %v2204
  %v2287 = vpack.c.b16 %v2207, %v2206
  %v2288 = vpack.c.b16 %v2209, %v2208
  %v2289 = vpack.c.b16 %v2211, %v2210
  %v2290 = vpack.c.b16 %v2213, %v2212
  %v2291 = vpack.c.b16 %v2215, %v2214
  %v2292 = vpack.c.b16 %v2217, %v2216
  %v2293 = vpack.c.b16 %v2219, %v2218
  %v2294 = vpack.c.b16 %v2221, %v2220
  %v2295 = vpack.c.b16 %v2223, %v2222
  %v2296 = vpack.c.b16 %v2225, %v2224
  %v2297 = vpack.c.b16 %v2227, %v2226
  %v2298 = vpack.c.b16 %v2229, %v2228
  %v2299 = vpack.c.b16 %v2231, %v2230
  %v2300 = vpack.c.b16 %v2233, %v2232
  %v2301 = vpack.c.b16 %v2235, %v2234
  %v2302 = vpack.c.b16 %v2237, %v2236
  %v2303 = vpack.c.b16 %v2239, %v2238
  %2368 = vmatprep.subr.bf16.mxu0 0
  %2369 = vmatpush1.bf16.msra.mxu0 %v2240
  %2370 = vmatprep.subr.bf16.mxu0 0
  %2371 = vmatpush1.bf16.msra.mxu0 %v2241
  %2372 = vmatprep.subr.bf16.mxu0 0
  %2373 = vmatpush1.bf16.msra.mxu0 %v2242
  %2374 = vmatprep.subr.bf16.mxu0 0
  %2375 = vmatpush1.bf16.msra.mxu0 %v2243
  %2376 = vmatprep.subr.bf16.mxu0 0
  %2377 = vmatpush1.bf16.msra.mxu0 %v2244
  %2378 = vmatprep.subr.bf16.mxu0 0
  %2379 = vmatpush1.bf16.msra.mxu0 %v2245
  %2380 = vmatprep.subr.bf16.mxu0 0
  %2381 = vmatpush1.bf16.msra.mxu0 %v2246
  %2382 = vmatprep.subr.bf16.mxu0 0
  %2383 = vmatpush1.bf16.msra.mxu0 %v2247
  %2384 = vmatprep.subr.bf16.mxu0 0
  %2385 = vmatpush1.bf16.msra.mxu0 %v2248
  %2386 = vmatprep.subr.bf16.mxu0 0
  %2387 = vmatpush1.bf16.msra.mxu0 %v2249
  %2388 = vmatprep.subr.bf16.mxu0 0
  %2389 = vmatpush1.bf16.msra.mxu0 %v2250
  %2390 = vmatprep.subr.bf16.mxu0 0
  %2391 = vmatpush1.bf16.msra.mxu0 %v2251
  %2392 = vmatprep.subr.bf16.mxu0 0
  %2393 = vmatpush1.bf16.msra.mxu0 %v2252
  %2394 = vmatprep.subr.bf16.mxu0 0
  %2395 = vmatpush1.bf16.msra.mxu0 %v2253
  %2396 = vmatprep.subr.bf16.mxu0 0
  %2397 = vmatpush1.bf16.msra.mxu0 %v2254
  %2398 = vmatprep.subr.bf16.mxu0 0
  %2399 = vmatpush1.bf16.msra.mxu0 %v2255
  %2400 = vmatprep.mubr.bf16.mxu0 %v1842
  %2401 = vmatmul.mubr.bf16.gmra.mrb[0].mxu0 %v1841
  %v2402 = vpop.f32.mrb[0].mxu0
  %v2403 = vadd.f32 %v1982, %v2402
  %v2404 = vpop.f32.mrb[0].mxu0
  %v2405 = vpop.f32.mrb[0].mxu0
  %v2406 = vpop.f32.mrb[0].mxu0
  %2407 = vdwg.mxu0
  %2408 = vmatprep.subr.bf16.mxu0 0
  %2409 = vmatpush1.bf16.msra.mxu0 %v2256
  %2410 = vmatprep.subr.bf16.mxu0 0
  %2411 = vmatpush1.bf16.msra.mxu0 %v2257
  %2412 = vmatprep.subr.bf16.mxu0 0
  %2413 = vmatpush1.bf16.msra.mxu0 %v2258
  %2414 = vmatprep.subr.bf16.mxu0 0
  %2415 = vmatpush1.bf16.msra.mxu0 %v2259
  %2416 = vmatprep.subr.bf16.mxu0 0
  %2417 = vmatpush1.bf16.msra.mxu0 %v2260
  %2418 = vmatprep.subr.bf16.mxu0 0
  %2419 = vmatpush1.bf16.msra.mxu0 %v2261
  %2420 = vmatprep.subr.bf16.mxu0 0
  %2421 = vmatpush1.bf16.msra.mxu0 %v2262
  %2422 = vmatprep.subr.bf16.mxu0 0
  %2423 = vmatpush1.bf16.msra.mxu0 %v2263
  %2424 = vmatprep.subr.bf16.mxu0 0
  %2425 = vmatpush1.bf16.msra.mxu0 %v2264
  %2426 = vmatprep.subr.bf16.mxu0 0
  %2427 = vmatpush1.bf16.msra.mxu0 %v2265
  %2428 = vmatprep.subr.bf16.mxu0 0
  %2429 = vmatpush1.bf16.msra.mxu0 %v2266
  %2430 = vmatprep.subr.bf16.mxu0 0
  %2431 = vmatpush1.bf16.msra.mxu0 %v2267
  %2432 = vmatprep.subr.bf16.mxu0 0
  %2433 = vmatpush1.bf16.msra.mxu0 %v2268
  %2434 = vmatprep.subr.bf16.mxu0 0
  %2435 = vmatpush1.bf16.msra.mxu0 %v2269
  %2436 = vmatprep.subr.bf16.mxu0 0
  %2437 = vmatpush1.bf16.msra.mxu0 %v2270
  %2438 = vmatprep.subr.bf16.mxu0 0
  %2439 = vmatpush1.bf16.msra.mxu0 %v2271
  %2440 = vmatprep.mubr.bf16.mxu0 %v1844
  %2441 = vmatmul.mubr.bf16.gmra.mrb[0].mxu0 %v1843
  %v2442 = vpop.f32.mrb[0].mxu0
  %v2443 = vadd.f32 %v2403, %v2442
  %v2444 = vpop.f32.mrb[0].mxu0
  %v2445 = vpop.f32.mrb[0].mxu0
  %v2446 = vpop.f32.mrb[0].mxu0
  %2447 = vdwg.mxu0
  %2448 = vmatprep.subr.bf16.mxu0 0
  %2449 = vmatpush1.bf16.msra.mxu0 %v2272
  %2450 = vmatprep.subr.bf16.mxu0 0
  %2451 = vmatpush1.bf16.msra.mxu0 %v2273
  %2452 = vmatprep.subr.bf16.mxu0 0
  %2453 = vmatpush1.bf16.msra.mxu0 %v2274
  %2454 = vmatprep.subr.bf16.mxu0 0
  %2455 = vmatpush1.bf16.msra.mxu0 %v2275
  %2456 = vmatprep.subr.bf16.mxu0 0
  %2457 = vmatpush1.bf16.msra.mxu0 %v2276
  %2458 = vmatprep.subr.bf16.mxu0 0
  %2459 = vmatpush1.bf16.msra.mxu0 %v2277
  %2460 = vmatprep.subr.bf16.mxu0 0
  %2461 = vmatpush1.bf16.msra.mxu0 %v2278
  %2462 = vmatprep.subr.bf16.mxu0 0
  %2463 = vmatpush1.bf16.msra.mxu0 %v2279
  %2464 = vmatprep.subr.bf16.mxu0 0
  %2465 = vmatpush1.bf16.msra.mxu0 %v2280
  %2466 = vmatprep.subr.bf16.mxu0 0
  %2467 = vmatpush1.bf16.msra.mxu0 %v2281
  %2468 = vmatprep.subr.bf16.mxu0 0
  %2469 = vmatpush1.bf16.msra.mxu0 %v2282
  %2470 = vmatprep.subr.bf16.mxu0 0
  %2471 = vmatpush1.bf16.msra.mxu0 %v2283
  %2472 = vmatprep.subr.bf16.mxu0 0
  %2473 = vmatpush1.bf16.msra.mxu0 %v2284
  %2474 = vmatprep.subr.bf16.mxu0 0
  %2475 = vmatpush1.bf16.msra.mxu0 %v2285
  %2476 = vmatprep.subr.bf16.mxu0 0
  %2477 = vmatpush1.bf16.msra.mxu0 %v2286
  %2478 = vmatprep.subr.bf16.mxu0 0
  %2479 = vmatpush1.bf16.msra.mxu0 %v2287
  %2480 = vmatprep.mubr.bf16.mxu0 %v1846
  %2481 = vmatmul.mubr.bf16.gmra.mrb[0].mxu0 %v1845
  %v2482 = vpop.f32.mrb[0].mxu0
  %v2483 = vadd.f32 %v2443, %v2482
  %v2484 = vpop.f32.mrb[0].mxu0
  %v2485 = vpop.f32.mrb[0].mxu0
  %v2486 = vpop.f32.mrb[0].mxu0
  %2487 = vdwg.mxu0
  %2488 = vmatprep.subr.bf16.mxu0 0
  %2489 = vmatpush1.bf16.msra.mxu0 %v2288
  %2490 = vmatprep.subr.bf16.mxu0 0
  %2491 = vmatpush1.bf16.msra.mxu0 %v2289
  %2492 = vmatprep.subr.bf16.mxu0 0
  %2493 = vmatpush1.bf16.msra.mxu0 %v2290
  %2494 = vmatprep.subr.bf16.mxu0 0
  %2495 = vmatpush1.bf16.msra.mxu0 %v2291
  %2496 = vmatprep.subr.bf16.mxu0 0
  %2497 = vmatpush1.bf16.msra.mxu0 %v2292
  %2498 = vmatprep.subr.bf16.mxu0 0
  %2499 = vmatpush1.bf16.msra.mxu0 %v2293
  %2500 = vmatprep.subr.bf16.mxu0 0
  %2501 = vmatpush1.bf16.msra.mxu0 %v2294
  %2502 = vmatprep.subr.bf16.mxu0 0
  %2503 = vmatpush1.bf16.msra.mxu0 %v2295
  %2504 = vmatprep.subr.bf16.mxu0 0
  %2505 = vmatpush1.bf16.msra.mxu0 %v2296
  %2506 = vmatprep.subr.bf16.mxu0 0
  %2507 = vmatpush1.bf16.msra.mxu0 %v2297
  %2508 = vmatprep.subr.bf16.mxu0 0
  %2509 = vmatpush1.bf16.msra.mxu0 %v2298
  %2510 = vmatprep.subr.bf16.mxu0 0
  %2511 = vmatpush1.bf16.msra.mxu0 %v2299
  %2512 = vmatprep.subr.bf16.mxu0 0
  %2513 = vmatpush1.bf16.msra.mxu0 %v2300
  %2514 = vmatprep.subr.bf16.mxu0 0
  %2515 = vmatpush1.bf16.msra.mxu0 %v2301
  %2516 = vmatprep.subr.bf16.mxu0 0
  %2517 = vmatpush1.bf16.msra.mxu0 %v2302
  %2518 = vmatprep.subr.bf16.mxu0 0
  %2519 = vmatpush1.bf16.msra.mxu0 %v2303
  %2520 = vmatprep.mubr.bf16.mxu0 %v1848
  %2521 = vmatmul.mubr.bf16.gmra.mrb[0].mxu0 %v1847
  %v2522 = vpop.f32.mrb[0].mxu0
  %v2523 = vadd.f32 %v2483, %v2522
  %v2524 = vpop.f32.mrb[0].mxu0
  %v2525 = vpop.f32.mrb[0].mxu0
  %v2526 = vpop.f32.mrb[0].mxu0
  %2527 = vdwg.mxu0
  %v2528 = vxor.u32 %v2523, 2147483648
  %v2529 = vmul.f32 %v2528, 1.442695
  %v2530 = vpow.pop %v2529
  %v2531 = vadd.f32 %v2530, 1.0
  %v2532 = vrcp.pop %v2531
  %v2533 = vmul.f32 1.0, %v2532
  %2534 = vst [vmem:[%s7] sm:$0xff] %v2533
  // Predicated region
  $region30: #{a_call__.1} parent=0 // pred_check
    _
  $region31: #{a_call__.1} parent=0 // pred_check_branch
    %2536 = sbr.rel (0) target = $region33
  $region32: #{a_call__.1} parent=0 // pred_region
    _
  $region33: #{a_call__.1} parent=0 // pred_fallthru
    _
  // Predicated region
  $region34: #{a_call__.1} parent=0 // pred_check
    _
  $region35: #{a_call__.1} parent=0 // pred_check_branch
    %2538 = sbr.rel (0) target = $region37
  $region36: #{a_call__.1} parent=0 // pred_region
    _
  $region37: #{a_call__.1} parent=0 // pred_fallthru
    _

</llo_original>
